<compile_context>
chip_gen: v7x
topology: tpu7x:2x2x1
jax: 0.10.0
libtpu: 0.0.40
codegen_flags: <defaults>
</compile_context>

<pallas_src>
from functools import partial

import jax
import jax.numpy as jnp
from jax.experimental import pallas as pl
from jax.experimental.pallas import tpu as pltpu


# ----------------------------- kernels ---------------------------------------


def sage_conv_relu_kernel(adj_ref, x_ref, xr_ref, invd_ref, wl_ref, wr_ref, b_ref,
                          o_ref, acc_ref):
    """One (row-tile, k-tile) grid step of SAGEConv(mean) + ReLU.

    adj_ref : (TM, TK)       bf16  adjacency edge counts (rows = dst, cols = src)
    x_ref   : (TK, F_in)     bf16  neighbor-feature K tile
    xr_ref  : (TM, F_in)     bf16  root features for this row tile
    invd_ref: (TM, 1)        f32   1 / max(deg, 1) for this row tile
    wl_ref  : (F_in, F_out)  bf16  lin_l^T (applied to mean-aggregated neighbors)
    wr_ref  : (F_in, F_out)  bf16  lin_r^T (applied to root features)
    b_ref   : (1, F_out)     f32   lin_l bias
    o_ref   : (TM, F_out)    output tile
    acc_ref : (TM, F_in)     f32   scratch accumulator for sum_j A[i, j] * x[j]
    """
    k = pl.program_id(1)

    @pl.when(k == 0)
    def _():
        acc_ref[...] = jnp.zeros_like(acc_ref)

    acc_ref[...] += jnp.dot(adj_ref[...], x_ref[...],
                            preferred_element_type=jnp.float32)

    @pl.when(k == pl.num_programs(1) - 1)
    def _():
        # f32 mean normalization (cheap VPU multiply), then cast for the MXU.
        mean = (acc_ref[...] * invd_ref[...]).astype(wl_ref.dtype)
        # Two independent MXU dots accumulating in f32 (no concat materialization;
        # the root dot has no dependence on the aggregation drain).
        out = jnp.dot(mean, wl_ref[...], preferred_element_type=jnp.float32)
        out += jnp.dot(xr_ref[...], wr_ref[...], preferred_element_type=jnp.float32)
        out += b_ref[...]
        o_ref[...] = jnp.maximum(out, 0.0).astype(o_ref.dtype)


def graphsage_fused_kernel(adj_ref, x_ref, invd_ref,
                           wl1_ref, wr1_ref, b1_ref,
                           wl2_ref, wr2_ref, b2_ref,
                           o_ref, h_ref):
    """Small-graph path: both SAGEConv + ReLU layers in a single launch."""
    invd = invd_ref[...]

    # ---- layer 1 ------------------------------------------------------------
    mean1 = (jnp.dot(adj_ref[...], x_ref[...], preferred_element_type=jnp.float32)
             * invd).astype(jnp.bfloat16)
    h = jnp.dot(mean1, wl1_ref[...], preferred_element_type=jnp.float32)
    h += jnp.dot(x_ref[...], wr1_ref[...], preferred_element_type=jnp.float32)
    h += b1_ref[...]
    h_ref[...] = jnp.maximum(h, 0.0).astype(h_ref.dtype)   # bf16 intermediate in VMEM

    # TODO(synk): nn.Dropout(p=0.1) between the layers is identity at inference.

    # ---- layer 2 ------------------------------------------------------------
    hb = h_ref[...]
    mean2 = (jnp.dot(adj_ref[...], hb, preferred_element_type=jnp.float32)
             * invd).astype(jnp.bfloat16)
    out = jnp.dot(mean2, wl2_ref[...], preferred_element_type=jnp.float32)
    out += jnp.dot(hb, wr2_ref[...], preferred_element_type=jnp.float32)
    out += b2_ref[...]
    o_ref[...] = jnp.maximum(out, 0.0).astype(o_ref.dtype)


# ----------------------------- sizing helpers ---------------------------------


def _round_up(v, m):
    return ((v + m - 1) // m) * m


def _vmem_cap_bytes():
    """~80% of the per-core VMEM; assume the smallest generation (v7x) if unknown."""
    try:
        cap = int(pltpu.get_tpu_info().vmem_capacity_bytes)
    except Exception:
        cap = 64 << 20          # v7x per-TensorCore VMEM
    return (cap * 4) // 5


def _clamp_limit(need_bytes):
    # 50% slack for compiler internals; floor 32 MiB; never above the physical cap.
    return int(min(_vmem_cap_bytes(), max(need_bytes + need_bytes // 2, 32 << 20)))


def _tiled_vmem_need(tm, tk, f_in, f_out, out_itemsize):
    bf = 2
    return (2 * tm * tk * bf                 # adj tile (double-buffered)
            + 2 * tk * f_in * bf             # neighbor-feature K tile (double-buffered)
            + 2 * tm * f_in * bf             # root-feature row tile (double-buffered)
            + 2 * tm * 4                     # 1/deg row tile
            + 2 * f_in * f_out * bf          # wl + wr (single-buffered, invariant)
            + f_out * 4                      # bias (single-buffered)
            + 2 * tm * f_out * out_itemsize  # output tile (double-buffered)
            + tm * f_in * 4)                 # f32 accumulator scratch


def _fused_vmem_need(n_pad, f_in, f_hid, f_out):
    bf = 2
    return (n_pad * n_pad * bf                           # adjacency (single-buffered)
            + n_pad * f_in * bf                          # x
            + n_pad * 4                                  # 1/deg
            + 2 * (f_in * f_hid + f_hid * f_out) * bf    # wl1 / wr1 / wl2 / wr2
            + (f_hid + f_out) * 4                        # biases
            + n_pad * f_hid * bf                         # h scratch
            + 2 * n_pad * f_out * 4                      # output (double-buffered)
            + 2 * n_pad * max(f_in, f_hid, f_out) * 4)   # live f32 temporaries


def _choose_tiling(n, tm_max=256, tk_max=1024):
    """Pad the node count to a multiple of 128 and pick row / reduction tiles."""
    n_pad = _round_up(max(n, 1), 128)
    if n_pad == 128:
        return n_pad, 128, 128
    tm = 128
    for cand in range(128, tm_max + 1, 128):
        # keep >= 2 row programs so v7x megacore has work for both TensorCores
        if n_pad % cand == 0 and n_pad // cand >= 2:
            tm = cand
    tk = 128
    for cand in range(128, tk_max + 1, 128):
        if n_pad % cand == 0:
            tk = cand
    return n_pad, tm, tk


# ----------------------------- wrappers ---------------------------------------


def _invariant_spec2(block_shape):
    """Grid-invariant operand on the 2-D grid: single-buffered."""
    return pl.BlockSpec(block_shape, lambda i, k: (0, 0),
                        pipeline_mode=pl.Buffered(1))


def sage_conv_relu(adj, inv_deg, x, wl, wr, b, *, tm, tk, out_dtype):
    """Row/K-tiled SAGEConv(mean) + ReLU.  All operands already padded."""
    n_pad = adj.shape[0]
    f_in = x.shape[1]
    f_out = wl.shape[1]
    grid = (n_pad // tm, n_pad // tk)

    return pl.pallas_call(
        sage_conv_relu_kernel,
        out_shape=jax.ShapeDtypeStruct((n_pad, f_out), out_dtype),
        grid=grid,
        in_specs=[
            pl.BlockSpec((tm, tk), lambda i, k: (i, k)),     # adj tile
            pl.BlockSpec((tk, f_in), lambda i, k: (k, 0)),   # neighbor features (K stream)
            pl.BlockSpec((tm, f_in), lambda i, k: (i, 0)),   # root features (row tile)
            pl.BlockSpec((tm, 1), lambda i, k: (i, 0)),      # 1/deg (row tile)
            _invariant_spec2((f_in, f_out)),                 # wl  (resident, 1-buffered)
            _invariant_spec2((f_in, f_out)),                 # wr
            _invariant_spec2((1, f_out)),                    # bias
        ],
        out_specs=pl.BlockSpec((tm, f_out), lambda i, k: (i, 0)),
        scratch_shapes=[pltpu.VMEM((tm, f_in), jnp.float32)],
        compiler_params=pltpu.CompilerParams(
            dimension_semantics=("parallel", "arbitrary"),
            vmem_limit_bytes=_clamp_limit(
                _tiled_vmem_need(tm, tk, f_in, f_out,
                                 jnp.dtype(out_dtype).itemsize)),
        ),
    )(adj, x, x, inv_deg, wl, wr, b)


def graphsage_fused(adj, inv_deg, x, wl1, wr1, b1, wl2, wr2, b2):
    """Single-launch two-layer forward for graphs that fit in VMEM."""
    n_pad = adj.shape[0]
    f_in = x.shape[1]
    f_hid = wl1.shape[1]
    f_out = wl2.shape[1]

    def inv(shape):   # everything is grid-invariant on the 1-step grid
        return pl.BlockSpec(shape, lambda i: (0, 0), pipeline_mode=pl.Buffered(1))

    return pl.pallas_call(
        graphsage_fused_kernel,
        out_shape=jax.ShapeDtypeStruct((n_pad, f_out), jnp.float32),
        grid=(1,),
        in_specs=[
            inv((n_pad, n_pad)),    # adj counts
            inv((n_pad, f_in)),     # x
            inv((n_pad, 1)),        # 1/deg
            inv((f_in, f_hid)),     # wl1
            inv((f_in, f_hid)),     # wr1
            inv((1, f_hid)),        # b1
            inv((f_hid, f_out)),    # wl2
            inv((f_hid, f_out)),    # wr2
            inv((1, f_out)),        # b2
        ],
        out_specs=pl.BlockSpec((n_pad, f_out), lambda i: (0, 0)),
        scratch_shapes=[pltpu.VMEM((n_pad, f_hid), jnp.bfloat16)],
        compiler_params=pltpu.CompilerParams(
            dimension_semantics=("arbitrary",),
            vmem_limit_bytes=_clamp_limit(
                _fused_vmem_need(n_pad, f_in, f_hid, f_out)),
        ),
    )(adj, x, inv_deg, wl1, wr1, b1, wl2, wr2, b2)


@partial(jax.jit, static_argnames=("num_nodes", "hidden_dim", "fused", "tm", "tk"))
def graphsage_forward(adj, inv_deg, x_pad, params, *, num_nodes, hidden_dim,
                      fused, tm, tk):
    """GraphSAGE.forward (inference): conv1 -> relu -> dropout(id) -> conv2 -> relu."""
    if fused:
        out = graphsage_fused(adj, inv_deg, x_pad,
                              params["wl1"], params["wr1"], params["b1"],
                              params["wl2"], params["wr2"], params["b2"])
    else:
        h = sage_conv_relu(adj, inv_deg, x_pad,
                           params["wl1"], params["wr1"], params["b1"],
                           tm=tm, tk=tk, out_dtype=jnp.bfloat16)
        # TODO(synk): dropout(p=0.1) -> identity at inference (no RNG mask).
        out = sage_conv_relu(adj, inv_deg, h,
                             params["wl2"], params["wr2"], params["b2"],
                             tm=tm, tk=tk, out_dtype=jnp.float32)
    return out[:num_nodes, :hidden_dim]


# --------------------------- plain-JAX glue -----------------------------------


def build_adjacency(edge_index, num_nodes, n_pad):
    """Dense adjacency as exact bf16 edge counts + f32 per-row 1/deg (mean aggr)."""
    src, dst = edge_index[0], edge_index[1]
    counts = jnp.zeros((n_pad, n_pad), jnp.float32).at[dst, src].add(1.0)
    deg = jnp.sum(counts, axis=1, keepdims=True)
    inv_deg = 1.0 / jnp.maximum(deg, 1.0)          # f32 normalization, kept exact
    return counts.astype(jnp.bfloat16), inv_deg


def pad_features(x, n_pad, f_pad):
    n, f = x.shape
    return jnp.zeros((n_pad, f_pad), jnp.float32).at[:n, :f].set(x).astype(jnp.bfloat16)


def prepare_layer_params(wl_t, wr_t, b, f_in_pad, f_out_pad):
    f_in, f_out = wl_t.shape

    def pad_w(w):
        return (jnp.zeros((f_in_pad, f_out_pad), jnp.float32)
                .at[:f_in, :f_out].set(w).astype(jnp.bfloat16))

    b_pad = jnp.zeros((1, f_out_pad), jnp.float32).at[:, :f_out].set(b)
    return pad_w(wl_t), pad_w(wr_t), b_pad


def init_sage_linear(key, f_in, f_out, with_bias):
    """Deterministic Glorot-ish init; returns (W^T [f_in,f_out], b [1,f_out] or None)."""
    k_w, k_b = jax.random.split(key)
    limit = (6.0 / (f_in + f_out)) ** 0.5
    w_t = jax.random.uniform(k_w, (f_in, f_out), jnp.float32, -limit, limit)
    b = jax.random.uniform(k_b, (1, f_out), jnp.float32, -limit, limit) if with_bias else None
    return w_t, b


def reference_forward(adj_counts, inv_deg, x_pad, params):
    """Plain-JAX f32 reference using the same bf16-quantized inputs (parity check)."""
    a = adj_counts.astype(jnp.float32)
    x = x_pad.astype(jnp.float32)

    def layer(x_in, wl, wr, b):
        mean = ((a @ x_in) * inv_deg).astype(jnp.bfloat16).astype(jnp.float32)
        out = mean @ wl.astype(jnp.float32) + x_in @ wr.astype(jnp.float32) + b
        return jnp.maximum(out, 0.0)

    h = layer(x, params["wl1"], params["wr1"], params["b1"])
    h = h.astype(jnp.bfloat16).astype(jnp.float32)
    return layer(h, params["wl2"], params["wr2"], params["b2"])


# ------------------------------- main -----------------------------------------


if __name__ == "__main__":
    # Small deterministic problem.
    num_nodes = 16
    num_edges = 48
    input_dim = 8
    hidden_dim = 16          # conv1 -> 32 features, conv2 -> 16 features

    key = jax.random.PRNGKey(0)
    k_x, k_e, k_l1l, k_l1r, k_l2l, k_l2r = jax.random.split(key, 6)

    x = jax.random.normal(k_x, (num_nodes, input_dim), dtype=jnp.float32)
    edge_index = jax.random.randint(k_e, (2, num_edges), 0, num_nodes, dtype=jnp.int32)

    # Padded / tiled geometry (feature dims lane-padded to 128).
    n_pad, tm, tk = _choose_tiling(num_nodes)
    f_in_pad = _round_up(input_dim, 128)
    f_hid_pad = _round_up(hidden_dim * 2, 128)
    f_out_pad = _round_up(hidden_dim, 128)

    # SAGEConv: lin_l (bias) on aggregated neighbors, lin_r (no bias) on root node.
    wl1_t, b1 = init_sage_linear(k_l1l, input_dim, hidden_dim * 2, True)
    wr1_t, _ = init_sage_linear(k_l1r, input_dim, hidden_dim * 2, False)
    wl2_t, b2 = init_sage_linear(k_l2l, hidden_dim * 2, hidden_dim, True)
    wr2_t, _ = init_sage_linear(k_l2r, hidden_dim * 2, hidden_dim, False)

    wl1, wr1, b1p = prepare_layer_params(wl1_t, wr1_t, b1, f_in_pad, f_hid_pad)
    wl2, wr2, b2p = prepare_layer_params(wl2_t, wr2_t, b2, f_hid_pad, f_out_pad)
    params = dict(wl1=wl1, wr1=wr1, b1=b1p, wl2=wl2, wr2=wr2, b2=b2p)

    # Built once, outside the per-forward path; shared by both layers / both paths.
    adj, inv_deg = build_adjacency(edge_index, num_nodes, n_pad)
    x_pad = pad_features(x, n_pad, f_in_pad)

    # Small graphs take the single fused launch; big graphs take the tiled path.
    use_fused = (2 * _fused_vmem_need(n_pad, f_in_pad, f_hid_pad, f_out_pad)
                 <= _vmem_cap_bytes())

    out = graphsage_forward(adj, inv_deg, x_pad, params,
                            num_nodes=num_nodes, hidden_dim=hidden_dim,
                            fused=use_fused, tm=tm, tk=tk)
    out = jax.block_until_ready(out)

    # Also exercise the tiled large-graph path and check both against plain JAX.
    out_tiled = graphsage_forward(adj, inv_deg, x_pad, params,
                                  num_nodes=num_nodes, hidden_dim=hidden_dim,
                                  fused=False, tm=tm, tk=tk)
    out_tiled = jax.block_until_ready(out_tiled)
    ref = reference_forward(adj, inv_deg, x_pad, params)[:num_nodes, :hidden_dim]

    assert out.shape == (num_nodes, hidden_dim)
    assert bool(jnp.all(jnp.isfinite(out)))
    assert bool(jnp.all(out >= 0.0))                     # ReLU output
    assert bool(jnp.allclose(out, ref, atol=5e-2, rtol=5e-2))
    assert bool(jnp.allclose(out_tiled, ref, atol=5e-2, rtol=5e-2))
    print("KERNEL_OK")
</pallas_src>

<mosaic_0001>
module attributes {stable_mosaic.version = 11 : i64} {
  func.func @graphsage_fused_kernel(%arg0: i32, %arg1: memref<128x128xbf16, #tpu.memory_space<vmem>>, %arg2: memref<128x128xbf16, #tpu.memory_space<vmem>>, %arg3: memref<128x1xf32, #tpu.memory_space<vmem>>, %arg4: memref<128x128xbf16, #tpu.memory_space<vmem>>, %arg5: memref<128x128xbf16, #tpu.memory_space<vmem>>, %arg6: memref<1x128xf32, #tpu.memory_space<vmem>>, %arg7: memref<128x128xbf16, #tpu.memory_space<vmem>>, %arg8: memref<128x128xbf16, #tpu.memory_space<vmem>>, %arg9: memref<1x128xf32, #tpu.memory_space<vmem>>, %arg10: memref<128x128xf32, #tpu.memory_space<vmem>>, %arg11: memref<128x128xbf16, #tpu.memory_space<vmem>>) attributes {dimension_semantics = [#tpu.dimension_semantics<arbitrary>], iteration_bounds = array<i64: 1>, scalar_prefetch = 0 : i64, scratch_operands = 1 : i64, tpu.core_type = #tpu.core_type<tc>, window_params = [{pipeline_mode = #tpu.pipeline_mode<synchronous>, transform_indices = @transform_0, window_bounds = array<i64: 128, 128>}, {pipeline_mode = #tpu.pipeline_mode<synchronous>, transform_indices = @transform_1, window_bounds = array<i64: 128, 128>}, {pipeline_mode = #tpu.pipeline_mode<synchronous>, transform_indices = @transform_2, window_bounds = array<i64: 128, 1>}, {pipeline_mode = #tpu.pipeline_mode<synchronous>, transform_indices = @transform_3, window_bounds = array<i64: 128, 128>}, {pipeline_mode = #tpu.pipeline_mode<synchronous>, transform_indices = @transform_4, window_bounds = array<i64: 128, 128>}, {pipeline_mode = #tpu.pipeline_mode<synchronous>, transform_indices = @transform_5, window_bounds = array<i64: 1, 128>}, {pipeline_mode = #tpu.pipeline_mode<synchronous>, transform_indices = @transform_6, window_bounds = array<i64: 128, 128>}, {pipeline_mode = #tpu.pipeline_mode<synchronous>, transform_indices = @transform_7, window_bounds = array<i64: 128, 128>}, {pipeline_mode = #tpu.pipeline_mode<synchronous>, transform_indices = @transform_8, window_bounds = array<i64: 1, 128>}, {pipeline_mode = #tpu.pipeline_mode<synchronous>, transform_indices = @transform_9, window_bounds = array<i64: 128, 128>}]} {
    %c0 = arith.constant 0 : index
    %c0_0 = arith.constant 0 : index
    %0 = vector.load %arg3[%c0, %c0_0] : memref<128x1xf32, #tpu.memory_space<vmem>>, vector<128x1xf32>
    %c0_1 = arith.constant 0 : index
    %c0_2 = arith.constant 0 : index
    %1 = vector.load %arg1[%c0_1, %c0_2] : memref<128x128xbf16, #tpu.memory_space<vmem>>, vector<128x128xbf16>
    %c0_3 = arith.constant 0 : index
    %c0_4 = arith.constant 0 : index
    %2 = vector.load %arg2[%c0_3, %c0_4] : memref<128x128xbf16, #tpu.memory_space<vmem>>, vector<128x128xbf16>
    %cst = arith.constant dense<0.000000e+00> : vector<128x128xf32>
    %3 = tpu.matmul %1, %2, %cst {dimension_numbers = #tpu.dot_dimension_numbers<[1], [0], [0], [1], [0, 0, 1, 1], [], []>} : vector<128x128xbf16>, vector<128x128xbf16>, vector<128x128xf32> -> vector<128x128xf32>
    %4 = vector.broadcast %0 : vector<128x1xf32> to vector<128x128xf32>
    %5 = arith.mulf %3, %4 : vector<128x128xf32>
    %6 = arith.truncf %5 : vector<128x128xf32> to vector<128x128xbf16>
    %c0_5 = arith.constant 0 : index
    %c0_6 = arith.constant 0 : index
    %7 = vector.load %arg4[%c0_5, %c0_6] : memref<128x128xbf16, #tpu.memory_space<vmem>>, vector<128x128xbf16>
    %cst_7 = arith.constant dense<0.000000e+00> : vector<128x128xf32>
    %8 = tpu.matmul %6, %7, %cst_7 {dimension_numbers = #tpu.dot_dimension_numbers<[1], [0], [0], [1], [0, 0, 1, 1], [], []>} : vector<128x128xbf16>, vector<128x128xbf16>, vector<128x128xf32> -> vector<128x128xf32>
    %c0_8 = arith.constant 0 : index
    %c0_9 = arith.constant 0 : index
    %9 = vector.load %arg2[%c0_8, %c0_9] : memref<128x128xbf16, #tpu.memory_space<vmem>>, vector<128x128xbf16>
    %c0_10 = arith.constant 0 : index
    %c0_11 = arith.constant 0 : index
    %10 = vector.load %arg5[%c0_10, %c0_11] : memref<128x128xbf16, #tpu.memory_space<vmem>>, vector<128x128xbf16>
    %cst_12 = arith.constant dense<0.000000e+00> : vector<128x128xf32>
    %11 = tpu.matmul %9, %10, %cst_12 {dimension_numbers = #tpu.dot_dimension_numbers<[1], [0], [0], [1], [0, 0, 1, 1], [], []>} : vector<128x128xbf16>, vector<128x128xbf16>, vector<128x128xf32> -> vector<128x128xf32>
    %12 = arith.addf %8, %11 : vector<128x128xf32>
    %c0_13 = arith.constant 0 : index
    %c0_14 = arith.constant 0 : index
    %13 = vector.load %arg6[%c0_13, %c0_14] : memref<1x128xf32, #tpu.memory_space<vmem>>, vector<1x128xf32>
    %14 = vector.broadcast %13 : vector<1x128xf32> to vector<128x128xf32>
    %15 = arith.addf %12, %14 : vector<128x128xf32>
    %cst_15 = arith.constant 0.000000e+00 : f32
    %16 = vector.broadcast %cst_15 : f32 to vector<128x128xf32>
    %17 = arith.maximumf %15, %16 : vector<128x128xf32>
    %18 = arith.truncf %17 : vector<128x128xf32> to vector<128x128xbf16>
    %c0_16 = arith.constant 0 : index
    %c0_17 = arith.constant 0 : index
    %19 = vector.load %arg11[%c0_16, %c0_17] : memref<128x128xbf16, #tpu.memory_space<vmem>>, vector<128x128xbf16>
    tpu.vector_store %arg11[%c0_16, %c0_17], %18 {strides = array<i32>} : memref<128x128xbf16, #tpu.memory_space<vmem>>, vector<128x128xbf16>,
    %c0_18 = arith.constant 0 : index
    %c0_19 = arith.constant 0 : index
    %20 = vector.load %arg11[%c0_18, %c0_19] : memref<128x128xbf16, #tpu.memory_space<vmem>>, vector<128x128xbf16>
    %c0_20 = arith.constant 0 : index
    %c0_21 = arith.constant 0 : index
    %21 = vector.load %arg1[%c0_20, %c0_21] : memref<128x128xbf16, #tpu.memory_space<vmem>>, vector<128x128xbf16>
    %cst_22 = arith.constant dense<0.000000e+00> : vector<128x128xf32>
    %22 = tpu.matmul %21, %20, %cst_22 {dimension_numbers = #tpu.dot_dimension_numbers<[1], [0], [0], [1], [0, 0, 1, 1], [], []>} : vector<128x128xbf16>, vector<128x128xbf16>, vector<128x128xf32> -> vector<128x128xf32>
    %23 = vector.broadcast %0 : vector<128x1xf32> to vector<128x128xf32>
    %24 = arith.mulf %22, %23 : vector<128x128xf32>
    %25 = arith.truncf %24 : vector<128x128xf32> to vector<128x128xbf16>
    %c0_23 = arith.constant 0 : index
    %c0_24 = arith.constant 0 : index
    %26 = vector.load %arg7[%c0_23, %c0_24] : memref<128x128xbf16, #tpu.memory_space<vmem>>, vector<128x128xbf16>
    %cst_25 = arith.constant dense<0.000000e+00> : vector<128x128xf32>
    %27 = tpu.matmul %25, %26, %cst_25 {dimension_numbers = #tpu.dot_dimension_numbers<[1], [0], [0], [1], [0, 0, 1, 1], [], []>} : vector<128x128xbf16>, vector<128x128xbf16>, vector<128x128xf32> -> vector<128x128xf32>
    %c0_26 = arith.constant 0 : index
    %c0_27 = arith.constant 0 : index
    %28 = vector.load %arg8[%c0_26, %c0_27] : memref<128x128xbf16, #tpu.memory_space<vmem>>, vector<128x128xbf16>
    %cst_28 = arith.constant dense<0.000000e+00> : vector<128x128xf32>
    %29 = tpu.matmul %20, %28, %cst_28 {dimension_numbers = #tpu.dot_dimension_numbers<[1], [0], [0], [1], [0, 0, 1, 1], [], []>} : vector<128x128xbf16>, vector<128x128xbf16>, vector<128x128xf32> -> vector<128x128xf32>
    %30 = arith.addf %27, %29 : vector<128x128xf32>
    %c0_29 = arith.constant 0 : index
    %c0_30 = arith.constant 0 : index
    %31 = vector.load %arg9[%c0_29, %c0_30] : memref<1x128xf32, #tpu.memory_space<vmem>>, vector<1x128xf32>
    %32 = vector.broadcast %31 : vector<1x128xf32> to vector<128x128xf32>
    %33 = arith.addf %30, %32 : vector<128x128xf32>
    %cst_31 = arith.constant 0.000000e+00 : f32
    %34 = vector.broadcast %cst_31 : f32 to vector<128x128xf32>
    %35 = arith.maximumf %33, %34 : vector<128x128xf32>
    %c0_32 = arith.constant 0 : index
    %c0_33 = arith.constant 0 : index
    %36 = vector.load %arg10[%c0_32, %c0_33] : memref<128x128xf32, #tpu.memory_space<vmem>>, vector<128x128xf32>
    tpu.vector_store %arg10[%c0_32, %c0_33], %35 {strides = array<i32>} : memref<128x128xf32, #tpu.memory_space<vmem>>, vector<128x128xf32>,
    return
  }
  func.func @transform_0(%arg0: i32) -> (i32, i32) {
    %c0_i32 = arith.constant 0 : i32
    %c0_i32_0 = arith.constant 0 : i32
    %c0_i32_1 = arith.constant 0 : i32
    return %c0_i32, %c0_i32_0 : i32, i32
  }
  func.func @transform_1(%arg0: i32) -> (i32, i32) {
    %c0_i32 = arith.constant 0 : i32
    %c0_i32_0 = arith.constant 0 : i32
    %c0_i32_1 = arith.constant 0 : i32
    return %c0_i32, %c0_i32_0 : i32, i32
  }
  func.func @transform_2(%arg0: i32) -> (i32, i32) {
    %c0_i32 = arith.constant 0 : i32
    %c0_i32_0 = arith.constant 0 : i32
    %c0_i32_1 = arith.constant 0 : i32
    return %c0_i32, %c0_i32_0 : i32, i32
  }
  func.func @transform_3(%arg0: i32) -> (i32, i32) {
    %c0_i32 = arith.constant 0 : i32
    %c0_i32_0 = arith.constant 0 : i32
    %c0_i32_1 = arith.constant 0 : i32
    return %c0_i32, %c0_i32_0 : i32, i32
  }
  func.func @transform_4(%arg0: i32) -> (i32, i32) {
    %c0_i32 = arith.constant 0 : i32
    %c0_i32_0 = arith.constant 0 : i32
    %c0_i32_1 = arith.constant 0 : i32
    return %c0_i32, %c0_i32_0 : i32, i32
  }
  func.func @transform_5(%arg0: i32) -> (i32, i32) {
    %c0_i32 = arith.constant 0 : i32
    %c0_i32_0 = arith.constant 0 : i32
    %c0_i32_1 = arith.constant 0 : i32
    return %c0_i32, %c0_i32_0 : i32, i32
  }
  func.func @transform_6(%arg0: i32) -> (i32, i32) {
    %c0_i32 = arith.constant 0 : i32
    %c0_i32_0 = arith.constant 0 : i32
    %c0_i32_1 = arith.constant 0 : i32
    return %c0_i32, %c0_i32_0 : i32, i32
  }
  func.func @transform_7(%arg0: i32) -> (i32, i32) {
    %c0_i32 = arith.constant 0 : i32
    %c0_i32_0 = arith.constant 0 : i32
    %c0_i32_1 = arith.constant 0 : i32
    return %c0_i32, %c0_i32_0 : i32, i32
  }
  func.func @transform_8(%arg0: i32) -> (i32, i32) {
    %c0_i32 = arith.constant 0 : i32
    %c0_i32_0 = arith.constant 0 : i32
    %c0_i32_1 = arith.constant 0 : i32
    return %c0_i32, %c0_i32_0 : i32, i32
  }
  func.func @transform_9(%arg0: i32) -> (i32, i32) {
    %c0_i32 = arith.constant 0 : i32
    %c0_i32_0 = arith.constant 0 : i32
    %c0_i32_1 = arith.constant 0 : i32
    return %c0_i32, %c0_i32_0 : i32, i32
  }
}

</mosaic_0001>

<llo_original>
// kernel: graphsage_forward.1
$region0: #{graphsage_forward.1}
  #allocation0 [shape = 'u32[]', space=smem, size = 0x4, offset = 0x4, fixed_abs, tag = 'smem constant byte address 0x4 - core index']
  #allocation1 [shape = 'u32[144,128]{1,0:T(1,128)}', space=vmem, size = 0x12000, scoped, tag = 'internal scratch']
  #allocation2 [shape = 'bf16[128,128]{1,0:T(16,128)(2,1)}', space=vmem, size = 0x8000, scoped, tag = 'scratch operand']
  %s0 = inlined_call_operand.vmem [shape: bf16[128,128], index: 0, kind: input, shape index: {}]
  %s1 = inlined_call_operand.vmem [shape: bf16[128,128], index: 1, kind: input, shape index: {}]
  %s2 = inlined_call_operand.vmem [shape: f32[128,1], index: 2, kind: input, shape index: {}]
  %s3 = inlined_call_operand.hbm [shape: bf16[128,128], index: 3, kind: input, shape index: {}]
  %s4 = inlined_call_operand.hbm [shape: bf16[128,128], index: 4, kind: input, shape index: {}]
  %s5 = inlined_call_operand.vmem [shape: f32[1,128], index: 5, kind: input, shape index: {}]
  %s6 = inlined_call_operand.hbm [shape: bf16[128,128], index: 6, kind: input, shape index: {}]
  %s7 = inlined_call_operand.hbm [shape: bf16[128,128], index: 7, kind: input, shape index: {}]
  %s8 = inlined_call_operand.vmem [shape: f32[1,128], index: 8, kind: input, shape index: {}]
  %s9 = inlined_call_operand.vmem [shape: f32[128,128], index: 9, kind: output, shape index: {}]
  %s10 = sld [smem:[#allocation0]]
  $region62: #{graphsage_forward.1} parent=0
    _
  %s12 = ssub.s32 1, %s10
  %s13 = scalar_select 0, %s12, %s10
  $region1: #{graphsage_forward.1} parent=0
    #allocation3 [shape = 'u8[32768]{0}', space=vmem, size = 0x8000, scoped, tag = 'input window, operand 3, single buffered']
    #allocation4 [shape = 's32[1]{0}', space=sflag, size = 0x4, scoped, tag = 'scoped memory for graphsage_forward.1']
    #allocation5 [shape = 'u8[32768]{0}', space=vmem, size = 0x8000, scoped, tag = 'input window, operand 4, single buffered']
    #allocation6 [shape = 's32[1]{0}', space=sflag, size = 0x4, scoped, tag = 'scoped memory for graphsage_forward.1']
    #allocation7 [shape = 'u8[32768]{0}', space=vmem, size = 0x8000, scoped, tag = 'input window, operand 6, single buffered']
    #allocation8 [shape = 'u8[32768]{0}', space=vmem, size = 0x8000, scoped, tag = 'input window, operand 7, single buffered']
    #allocation9 [shape = 's32[1]{0}', space=sflag, size = 0x4, scoped, tag = 'scoped memory for graphsage_forward.1']
    %14 = vsyncpa [#allocation4], 0
    %15 = vsyncpa [#allocation6], 0
    %16 = vsyncpa [#allocation9], 0
    // Predicated region
    $region2: #{graphsage_forward.1} parent=1 // pred_check
      _
    $region3: #{graphsage_forward.1} parent=1 // pred_check_branch
      %18 = sbr.rel (0) target = $region5
    $region4: #{graphsage_forward.1} parent=1 // pred_region
      _
    $region5: #{graphsage_forward.1} parent=1 // pred_fallthru
      _
    // Predicated region
    $region6: #{graphsage_forward.1} parent=1 // pred_check
      _
    $region7: #{graphsage_forward.1} parent=1 // pred_check_branch
      %20 = sbr.rel (0) target = $region9
    $region8: #{graphsage_forward.1} parent=1 // pred_region
      _
    $region9: #{graphsage_forward.1} parent=1 // pred_fallthru
      _
    // Predicated region
    $region10: #{graphsage_forward.1} parent=1 // pred_check
      _
    $region11: #{graphsage_forward.1} parent=1 // pred_check_branch
      %22 = sbr.rel (0) target = $region13
    $region12: #{graphsage_forward.1} parent=1 // pred_region
      _
    $region13: #{graphsage_forward.1} parent=1 // pred_fallthru
      _
    // Predicated region
    $region14: #{graphsage_forward.1} parent=1 // pred_check
      _
    $region15: #{graphsage_forward.1} parent=1 // pred_check_branch
      %24 = sbr.rel (0) target = $region17
    $region16: #{graphsage_forward.1} parent=1 // pred_region
      %s26 = ssub.s32 1024, 1024
      %27 = vsyncadd [#allocation4], %s26
      %s28 = sshll.u32 [#allocation3], 4
      %s29 = int_to_ptr.vmem [resolvable:$true] %s28
      %34 = dma.hbm_to_vmem [thread:$0]  %s3, 1024, %s29, [#allocation4], 64, 64, 4
    $region17: #{graphsage_forward.1} parent=1 // pred_fallthru
      _
    // Predicated region
    $region18: #{graphsage_forward.1} parent=1 // pred_check
      _
    $region19: #{graphsage_forward.1} parent=1 // pred_check_branch
      %36 = sbr.rel (0) target = $region21
    $region20: #{graphsage_forward.1} parent=1 // pred_region
      %s38 = ssub.s32 1024, 1024
      %39 = vsyncadd [#allocation6], %s38
      %s40 = sshll.u32 [#allocation5], 4
      %s41 = int_to_ptr.vmem [resolvable:$true] %s40
      %46 = dma.hbm_to_vmem [thread:$0]  %s4, 1024, %s41, [#allocation6], 64, 64, 4
    $region21: #{graphsage_forward.1} parent=1 // pred_fallthru
      _
    // Predicated region
    $region22: #{graphsage_forward.1} parent=1 // pred_check
      _
    $region23: #{graphsage_forward.1} parent=1 // pred_check_branch
      %48 = sbr.rel (0) target = $region25
    $region24: #{graphsage_forward.1} parent=1 // pred_region
      _
    $region25: #{graphsage_forward.1} parent=1 // pred_fallthru
      _
    // Predicated region
    $region26: #{graphsage_forward.1} parent=1 // pred_check
      _
    $region27: #{graphsage_forward.1} parent=1 // pred_check_branch
      %50 = sbr.rel (0) target = $region29
    $region28: #{graphsage_forward.1} parent=1 // pred_region
      %s52 = ssub.s32 1024, 1024
      %53 = vsyncadd [#allocation6], %s52
      %s54 = sshll.u32 [#allocation7], 4
      %s55 = int_to_ptr.vmem [resolvable:$true] %s54
      %60 = dma.hbm_to_vmem [thread:$0]  %s6, 1024, %s55, [#allocation6], 64, 64, 4
    $region29: #{graphsage_forward.1} parent=1 // pred_fallthru
      _
    // Predicated region
    $region30: #{graphsage_forward.1} parent=1 // pred_check
      _
    $region31: #{graphsage_forward.1} parent=1 // pred_check_branch
      %62 = sbr.rel (0) target = $region33
    $region32: #{graphsage_forward.1} parent=1 // pred_region
      %s64 = ssub.s32 1024, 1024
      %65 = vsyncadd [#allocation9], %s64
      %s66 = sshll.u32 [#allocation8], 4
      %s67 = int_to_ptr.vmem [resolvable:$true] %s66
      %72 = dma.hbm_to_vmem [thread:$0]  %s7, 1024, %s67, [#allocation9], 64, 64, 4
    $region33: #{graphsage_forward.1} parent=1 // pred_fallthru
      _
    // Predicated region
    $region34: #{graphsage_forward.1} parent=1 // pred_check
      _
    $region35: #{graphsage_forward.1} parent=1 // pred_check_branch
      %74 = sbr.rel (0) target = $region37
    $region36: #{graphsage_forward.1} parent=1 // pred_region
      _
    $region37: #{graphsage_forward.1} parent=1 // pred_fallthru
      _
    // Predicated region
    $region38: #{graphsage_forward.1} parent=1 // pred_check
      _
    $region39: #{graphsage_forward.1} parent=1 // pred_check_branch
      %76 = sbr.rel (0) target = $region41
    $region40: #{graphsage_forward.1} parent=1 // pred_region
      %77 = dma.done [#allocation4], 1024
    $region41: #{graphsage_forward.1} parent=1 // pred_fallthru
      _
    // Predicated region
    $region42: #{graphsage_forward.1} parent=1 // pred_check
      _
    $region43: #{graphsage_forward.1} parent=1 // pred_check_branch
      %79 = sbr.rel (0) target = $region45
    $region44: #{graphsage_forward.1} parent=1 // pred_region
      %80 = dma.done [#allocation6], 1024
    $region45: #{graphsage_forward.1} parent=1 // pred_fallthru
      _
    // Predicated region
    $region46: #{graphsage_forward.1} parent=1 // pred_check
      _
    $region47: #{graphsage_forward.1} parent=1 // pred_check_branch
      %82 = sbr.rel (0) target = $region49
    $region48: #{graphsage_forward.1} parent=1 // pred_region
      %83 = dma.done [#allocation6], 1024
    $region49: #{graphsage_forward.1} parent=1 // pred_fallthru
      _
    // Predicated region
    $region50: #{graphsage_forward.1} parent=1 // pred_check
      _
    $region51: #{graphsage_forward.1} parent=1 // pred_check_branch
      %85 = sbr.rel (0) target = $region53
    $region52: #{graphsage_forward.1} parent=1 // pred_region
      %86 = dma.done [#allocation9], 1024
    $region53: #{graphsage_forward.1} parent=1 // pred_fallthru
      _
    %v88 = vld [vmem:[%s2] sm:$0xff]
    %v89 = vld [vmem:[%s2 + $0x8] sm:$0xff]
    %v90 = vld [vmem:[%s2 + $0x10] sm:$0xff]
    %v91 = vld [vmem:[%s2 + $0x18] sm:$0xff]
    %v92 = vld [vmem:[%s2 + $0x20] sm:$0xff]
    %v93 = vld [vmem:[%s2 + $0x28] sm:$0xff]
    %v94 = vld [vmem:[%s2 + $0x30] sm:$0xff]
    %v95 = vld [vmem:[%s2 + $0x38] sm:$0xff]
    %v96 = vld [vmem:[%s2 + $0x40] sm:$0xff]
    %v97 = vld [vmem:[%s2 + $0x48] sm:$0xff]
    %v98 = vld [vmem:[%s2 + $0x50] sm:$0xff]
    %v99 = vld [vmem:[%s2 + $0x58] sm:$0xff]
    %v100 = vld [vmem:[%s2 + $0x60] sm:$0xff]
    %v101 = vld [vmem:[%s2 + $0x68] sm:$0xff]
    %v102 = vld [vmem:[%s2 + $0x70] sm:$0xff]
    %v103 = vld [vmem:[%s2 + $0x78] sm:$0xff]
    %v104 = vld [vmem:[%s0] sm:$0xf]
    %v105 = vld [vmem:[%s0 + $0x4] sm:$0xf]
    %v106 = vld [vmem:[%s0 + $0x8] sm:$0xf]
    %v107 = vld [vmem:[%s0 + $0xc] sm:$0xf]
    %v108 = vld [vmem:[%s0 + $0x10] sm:$0xf]
    %v109 = vld [vmem:[%s0 + $0x14] sm:$0xf]
    %v110 = vld [vmem:[%s0 + $0x18] sm:$0xf]
    %v111 = vld [vmem:[%s0 + $0x1c] sm:$0xf]
    %v112 = vld [vmem:[%s0 + $0x20] sm:$0xf]
    %v113 = vld [vmem:[%s0 + $0x24] sm:$0xf]
    %v114 = vld [vmem:[%s0 + $0x28] sm:$0xf]
    %v115 = vld [vmem:[%s0 + $0x2c] sm:$0xf]
    %v116 = vld [vmem:[%s0 + $0x30] sm:$0xf]
    %v117 = vld [vmem:[%s0 + $0x34] sm:$0xf]
    %v118 = vld [vmem:[%s0 + $0x38] sm:$0xf]
    %v119 = vld [vmem:[%s0 + $0x3c] sm:$0xf]
    %v120 = vld [vmem:[%s1] sm:$0xf]
    %v121 = vld [vmem:[%s1 + $0x4] sm:$0xf]
    %v122 = vld [vmem:[%s1 + $0x8] sm:$0xf]
    %v123 = vld [vmem:[%s1 + $0xc] sm:$0xf]
    %v124 = vld [vmem:[%s1 + $0x10] sm:$0xf]
    %v125 = vld [vmem:[%s1 + $0x14] sm:$0xf]
    %v126 = vld [vmem:[%s1 + $0x18] sm:$0xf]
    %v127 = vld [vmem:[%s1 + $0x1c] sm:$0xf]
    %v128 = vld [vmem:[%s1 + $0x20] sm:$0xf]
    %v129 = vld [vmem:[%s1 + $0x24] sm:$0xf]
    %v130 = vld [vmem:[%s1 + $0x28] sm:$0xf]
    %v131 = vld [vmem:[%s1 + $0x2c] sm:$0xf]
    %v132 = vld [vmem:[%s1 + $0x30] sm:$0xf]
    %v133 = vld [vmem:[%s1 + $0x34] sm:$0xf]
    %v134 = vld [vmem:[%s1 + $0x38] sm:$0xf]
    %v135 = vld [vmem:[%s1 + $0x3c] sm:$0xf]
    %v152 = vunpack.c.l.b16 %v104
    %v153 = vunpack.c.l.b16 %v105
    %v154 = vunpack.c.l.b16 %v106
    %v155 = vunpack.c.l.b16 %v107
    %v156 = vunpack.c.l.b16 %v108
    %v157 = vunpack.c.l.b16 %v109
    %v158 = vunpack.c.l.b16 %v110
    %v159 = vunpack.c.l.b16 %v111
    %v160 = vunpack.c.l.b16 %v112
    %v161 = vunpack.c.l.b16 %v113
    %v162 = vunpack.c.l.b16 %v114
    %v163 = vunpack.c.l.b16 %v115
    %v164 = vunpack.c.l.b16 %v116
    %v165 = vunpack.c.l.b16 %v117
    %v166 = vunpack.c.l.b16 %v118
    %v167 = vunpack.c.l.b16 %v119
    %v168 = vpack.c.b16 %v153, %v152
    %v169 = vpack.c.b16 %v155, %v154
    %v170 = vpack.c.b16 %v157, %v156
    %v171 = vpack.c.b16 %v159, %v158
    %v172 = vpack.c.b16 %v161, %v160
    %v173 = vpack.c.b16 %v163, %v162
    %v174 = vpack.c.b16 %v165, %v164
    %v175 = vpack.c.b16 %v167, %v166
    %v200 = vunpack.c.l.b16 %v120
    %v201 = vunpack.c.l.b16 %v121
    %v202 = vunpack.c.l.b16 %v122
    %v203 = vunpack.c.l.b16 %v123
    %v204 = vunpack.c.l.b16 %v124
    %v205 = vunpack.c.l.b16 %v125
    %v206 = vunpack.c.l.b16 %v126
    %v207 = vunpack.c.l.b16 %v127
    %v208 = vunpack.c.l.b16 %v128
    %v209 = vunpack.c.l.b16 %v129
    %v210 = vunpack.c.l.b16 %v130
    %v211 = vunpack.c.l.b16 %v131
    %v212 = vunpack.c.l.b16 %v132
    %v213 = vunpack.c.l.b16 %v133
    %v214 = vunpack.c.l.b16 %v134
    %v215 = vunpack.c.l.b16 %v135
    %v216 = vpack.c.b16 %v201, %v200
    %v217 = vpack.c.b16 %v203, %v202
    %v218 = vpack.c.b16 %v205, %v204
    %v219 = vpack.c.b16 %v207, %v206
    %v220 = vpack.c.b16 %v209, %v208
    %v221 = vpack.c.b16 %v211, %v210
    %v222 = vpack.c.b16 %v213, %v212
    %v223 = vpack.c.b16 %v215, %v214
    %232 = vmatprep.subr.bf16.mxu0 0
    %233 = vmatpush1.bf16.msra.mxu0 %v216
    %234 = vmatprep.subr.bf16.mxu0 0
    %235 = vmatpush1.bf16.msra.mxu0 %v217
    %236 = vmatprep.subr.bf16.mxu0 0
    %237 = vmatpush1.bf16.msra.mxu0 %v218
    %238 = vmatprep.subr.bf16.mxu0 0
    %239 = vmatpush1.bf16.msra.mxu0 %v219
    %240 = vmatprep.subr.bf16.mxu0 0
    %241 = vmatpush1.bf16.msra.mxu0 %v220
    %242 = vmatprep.subr.bf16.mxu0 0
    %243 = vmatpush1.bf16.msra.mxu0 %v221
    %244 = vmatprep.subr.bf16.mxu0 0
    %245 = vmatpush1.bf16.msra.mxu0 %v222
    %246 = vmatprep.subr.bf16.mxu0 0
    %247 = vmatpush1.bf16.msra.mxu0 %v223
    %248 = vmatprep.subr.bf16.mxu0 0
    %249 = vmatpush1.bf16.msra.mxu0 0
    %250 = vmatprep.subr.bf16.mxu0 0
    %251 = vmatpush1.bf16.msra.mxu0 0
    %252 = vmatprep.subr.bf16.mxu0 0
    %253 = vmatpush1.bf16.msra.mxu0 0
    %254 = vmatprep.subr.bf16.mxu0 0
    %255 = vmatpush1.bf16.msra.mxu0 0
    %256 = vmatprep.subr.bf16.mxu0 0
    %257 = vmatpush1.bf16.msra.mxu0 0
    %258 = vmatprep.subr.bf16.mxu0 0
    %259 = vmatpush1.bf16.msra.mxu0 0
    %260 = vmatprep.subr.bf16.mxu0 0
    %261 = vmatpush1.bf16.msra.mxu0 0
    %262 = vmatprep.subr.bf16.mxu0 0
    %263 = vmatpush1.bf16.msra.mxu0 0
    %264 = vmatprep.mubr.bf16.mxu0 0
    %265 = vmatmul.mubr.bf16.gmra.mrb[0].mxu0 %v168
    %v266 = vpop.f32.mrb[0].mxu0
    %v267 = vadd.f32 0.0, %v266
    %v268 = vpop.f32.mrb[0].mxu0
    %v269 = vpop.f32.mrb[0].mxu0
    %v270 = vadd.f32 0.0, %v269
    %v271 = vpop.f32.mrb[0].mxu0
    %272 = vmatprep.mubr.bf16.mxu0 0
    %273 = vmatmul.mubr.bf16.gmra.mrb[0].mxu0 %v169
    %v274 = vpop.f32.mrb[0].mxu0
    %v275 = vadd.f32 0.0, %v274
    %v276 = vpop.f32.mrb[0].mxu0
    %v277 = vpop.f32.mrb[0].mxu0
    %v278 = vadd.f32 0.0, %v277
    %v279 = vpop.f32.mrb[0].mxu0
    %280 = vmatprep.mubr.bf16.mxu0 0
    %281 = vmatmul.mubr.bf16.gmra.mrb[0].mxu0 %v170
    %v282 = vpop.f32.mrb[0].mxu0
    %v283 = vadd.f32 0.0, %v282
    %v284 = vpop.f32.mrb[0].mxu0
    %v285 = vpop.f32.mrb[0].mxu0
    %v286 = vadd.f32 0.0, %v285
    %v287 = vpop.f32.mrb[0].mxu0
    %288 = vmatprep.mubr.bf16.mxu0 0
    %289 = vmatmul.mubr.bf16.gmra.mrb[0].mxu0 %v171
    %v290 = vpop.f32.mrb[0].mxu0
    %v291 = vadd.f32 0.0, %v290
    %v292 = vpop.f32.mrb[0].mxu0
    %v293 = vpop.f32.mrb[0].mxu0
    %v294 = vadd.f32 0.0, %v293
    %v295 = vpop.f32.mrb[0].mxu0
    %296 = vmatprep.mubr.bf16.mxu0 0
    %297 = vmatmul.mubr.bf16.gmra.mrb[0].mxu0 %v172
    %v298 = vpop.f32.mrb[0].mxu0
    %v299 = vadd.f32 0.0, %v298
    %v300 = vpop.f32.mrb[0].mxu0
    %v301 = vpop.f32.mrb[0].mxu0
    %v302 = vadd.f32 0.0, %v301
    %v303 = vpop.f32.mrb[0].mxu0
    %304 = vmatprep.mubr.bf16.mxu0 0
    %305 = vmatmul.mubr.bf16.gmra.mrb[0].mxu0 %v173
    %v306 = vpop.f32.mrb[0].mxu0
    %v307 = vadd.f32 0.0, %v306
    %v308 = vpop.f32.mrb[0].mxu0
    %v309 = vpop.f32.mrb[0].mxu0
    %v310 = vadd.f32 0.0, %v309
    %v311 = vpop.f32.mrb[0].mxu0
    %312 = vmatprep.mubr.bf16.mxu0 0
    %313 = vmatmul.mubr.bf16.gmra.mrb[0].mxu0 %v174
    %v314 = vpop.f32.mrb[0].mxu0
    %v315 = vadd.f32 0.0, %v314
    %v316 = vpop.f32.mrb[0].mxu0
    %v317 = vpop.f32.mrb[0].mxu0
    %v318 = vadd.f32 0.0, %v317
    %v319 = vpop.f32.mrb[0].mxu0
    %320 = vmatprep.mubr.bf16.mxu0 0
    %321 = vmatmul.mubr.bf16.gmra.mrb[0].mxu0 %v175
    %v322 = vpop.f32.mrb[0].mxu0
    %v323 = vadd.f32 0.0, %v322
    %v324 = vpop.f32.mrb[0].mxu0
    %v325 = vpop.f32.mrb[0].mxu0
    %v326 = vadd.f32 0.0, %v325
    %v327 = vpop.f32.mrb[0].mxu0
    %328 = vdwg.mxu0
    %330 = vset.pattern.permute.xlu0 0
    %331 = vperm.xlu0 %330, %v88
    %v332 = vpop.permute.xlu0 %331
    %335 = vset.pattern.permute.xlu0 0
    %336 = vperm.xlu0 %335, %v89
    %v337 = vpop.permute.xlu0 %336
    %340 = vset.pattern.permute.xlu0 0
    %341 = vperm.xlu0 %340, %v90
    %v342 = vpop.permute.xlu0 %341
    %345 = vset.pattern.permute.xlu0 0
    %346 = vperm.xlu0 %345, %v91
    %v347 = vpop.permute.xlu0 %346
    %350 = vset.pattern.permute.xlu0 0
    %351 = vperm.xlu0 %350, %v92
    %v352 = vpop.permute.xlu0 %351
    %355 = vset.pattern.permute.xlu0 0
    %356 = vperm.xlu0 %355, %v93
    %v357 = vpop.permute.xlu0 %356
    %360 = vset.pattern.permute.xlu0 0
    %361 = vperm.xlu0 %360, %v94
    %v362 = vpop.permute.xlu0 %361
    %365 = vset.pattern.permute.xlu0 0
    %366 = vperm.xlu0 %365, %v95
    %v367 = vpop.permute.xlu0 %366
    %370 = vset.pattern.permute.xlu0 0
    %371 = vperm.xlu0 %370, %v96
    %v372 = vpop.permute.xlu0 %371
    %375 = vset.pattern.permute.xlu0 0
    %376 = vperm.xlu0 %375, %v97
    %v377 = vpop.permute.xlu0 %376
    %380 = vset.pattern.permute.xlu0 0
    %381 = vperm.xlu0 %380, %v98
    %v382 = vpop.permute.xlu0 %381
    %385 = vset.pattern.permute.xlu0 0
    %386 = vperm.xlu0 %385, %v99
    %v387 = vpop.permute.xlu0 %386
    %390 = vset.pattern.permute.xlu0 0
    %391 = vperm.xlu0 %390, %v100
    %v392 = vpop.permute.xlu0 %391
    %395 = vset.pattern.permute.xlu0 0
    %396 = vperm.xlu0 %395, %v101
    %v397 = vpop.permute.xlu0 %396
    %400 = vset.pattern.permute.xlu0 0
    %401 = vperm.xlu0 %400, %v102
    %v402 = vpop.permute.xlu0 %401
    %405 = vset.pattern.permute.xlu0 0
    %406 = vperm.xlu0 %405, %v103
    %v407 = vpop.permute.xlu0 %406
    %v409 = vmul.f32 %v267, %v332
    %v410 = vmul.f32 %v270, %v337
    %v411 = vmul.f32 %v275, %v342
    %v412 = vmul.f32 %v278, %v347
    %v413 = vmul.f32 %v283, %v352
    %v414 = vmul.f32 %v286, %v357
    %v415 = vmul.f32 %v291, %v362
    %v416 = vmul.f32 %v294, %v367
    %v417 = vmul.f32 %v299, %v372
    %v418 = vmul.f32 %v302, %v377
    %v419 = vmul.f32 %v307, %v382
    %v420 = vmul.f32 %v310, %v387
    %v421 = vmul.f32 %v315, %v392
    %v422 = vmul.f32 %v318, %v397
    %v423 = vmul.f32 %v323, %v402
    %v424 = vmul.f32 %v326, %v407
    %v425 = vpack.c.bf16 %v410, %v409
    %v426 = vpack.c.bf16 %v412, %v411
    %v427 = vpack.c.bf16 %v414, %v413
    %v428 = vpack.c.bf16 %v416, %v415
    %v429 = vpack.c.bf16 %v418, %v417
    %v430 = vpack.c.bf16 %v420, %v419
    %v431 = vpack.c.bf16 %v422, %v421
    %v432 = vpack.c.bf16 %v424, %v423
    %v433 = vld [vmem:[#allocation3] sm:$0xf]
    %v434 = vld [vmem:[#allocation3 + $0x4] sm:$0xf]
    %v435 = vld [vmem:[#allocation3 + $0x8] sm:$0xf]
    %v436 = vld [vmem:[#allocation3 + $0xc] sm:$0xf]
    %v437 = vld [vmem:[#allocation3 + $0x10] sm:$0xf]
    %v438 = vld [vmem:[#allocation3 + $0x14] sm:$0xf]
    %v439 = vld [vmem:[#allocation3 + $0x18] sm:$0xf]
    %v440 = vld [vmem:[#allocation3 + $0x1c] sm:$0xf]
    %v441 = vld [vmem:[#allocation3 + $0x20] sm:$0xf]
    %v442 = vld [vmem:[#allocation3 + $0x24] sm:$0xf]
    %v443 = vld [vmem:[#allocation3 + $0x28] sm:$0xf]
    %v444 = vld [vmem:[#allocation3 + $0x2c] sm:$0xf]
    %v445 = vld [vmem:[#allocation3 + $0x30] sm:$0xf]
    %v446 = vld [vmem:[#allocation3 + $0x34] sm:$0xf]
    %v447 = vld [vmem:[#allocation3 + $0x38] sm:$0xf]
    %v448 = vld [vmem:[#allocation3 + $0x3c] sm:$0xf]
    %v449 = vld [vmem:[#allocation5] sm:$0xf]
    %v450 = vld [vmem:[#allocation5 + $0x4] sm:$0xf]
    %v451 = vld [vmem:[#allocation5 + $0x8] sm:$0xf]
    %v452 = vld [vmem:[#allocation5 + $0xc] sm:$0xf]
    %v453 = vld [vmem:[#allocation5 + $0x10] sm:$0xf]
    %v454 = vld [vmem:[#allocation5 + $0x14] sm:$0xf]
    %v455 = vld [vmem:[#allocation5 + $0x18] sm:$0xf]
    %v456 = vld [vmem:[#allocation5 + $0x1c] sm:$0xf]
    %v457 = vld [vmem:[#allocation5 + $0x20] sm:$0xf]
    %v458 = vld [vmem:[#allocation5 + $0x24] sm:$0xf]
    %v459 = vld [vmem:[#allocation5 + $0x28] sm:$0xf]
    %v460 = vld [vmem:[#allocation5 + $0x2c] sm:$0xf]
    %v461 = vld [vmem:[#allocation5 + $0x30] sm:$0xf]
    %v462 = vld [vmem:[#allocation5 + $0x34] sm:$0xf]
    %v463 = vld [vmem:[#allocation5 + $0x38] sm:$0xf]
    %v464 = vld [vmem:[#allocation5 + $0x3c] sm:$0xf]
    %v481 = vunpack.c.l.b16 %v449
    %v482 = vunpack.c.l.b16 %v450
    %v483 = vunpack.c.l.b16 %v451
    %v484 = vunpack.c.l.b16 %v452
    %v485 = vunpack.c.l.b16 %v453
    %v486 = vunpack.c.l.b16 %v454
    %v487 = vunpack.c.l.b16 %v455
    %v488 = vunpack.c.l.b16 %v456
    %v489 = vunpack.c.l.b16 %v457
    %v490 = vunpack.c.l.b16 %v458
    %v491 = vunpack.c.l.b16 %v459
    %v492 = vunpack.c.l.b16 %v460
    %v493 = vunpack.c.l.b16 %v461
    %v494 = vunpack.c.l.b16 %v462
    %v495 = vunpack.c.l.b16 %v463
    %v496 = vunpack.c.l.b16 %v464
    %v497 = vpack.c.b16 %v482, %v481
    %v498 = vpack.c.b16 %v484, %v483
    %v499 = vpack.c.b16 %v486, %v485
    %v500 = vpack.c.b16 %v488, %v487
    %v501 = vpack.c.b16 %v490, %v489
    %v502 = vpack.c.b16 %v492, %v491
    %v503 = vpack.c.b16 %v494, %v493
    %v504 = vpack.c.b16 %v496, %v495
    %513 = vmatprep.subr.bf16.mxu0 0
    %514 = vmatpush1.bf16.msra.mxu0 %v497
    %515 = vmatprep.subr.bf16.mxu0 0
    %516 = vmatpush1.bf16.msra.mxu0 %v498
    %517 = vmatprep.subr.bf16.mxu0 0
    %518 = vmatpush1.bf16.msra.mxu0 %v499
    %519 = vmatprep.subr.bf16.mxu0 0
    %520 = vmatpush1.bf16.msra.mxu0 %v500
    %521 = vmatprep.subr.bf16.mxu0 0
    %522 = vmatpush1.bf16.msra.mxu0 %v501
    %523 = vmatprep.subr.bf16.mxu0 0
    %524 = vmatpush1.bf16.msra.mxu0 %v502
    %525 = vmatprep.subr.bf16.mxu0 0
    %526 = vmatpush1.bf16.msra.mxu0 %v503
    %527 = vmatprep.subr.bf16.mxu0 0
    %528 = vmatpush1.bf16.msra.mxu0 %v504
    %529 = vmatprep.subr.bf16.mxu0 0
    %530 = vmatpush1.bf16.msra.mxu0 0
    %531 = vmatprep.subr.bf16.mxu0 0
    %532 = vmatpush1.bf16.msra.mxu0 0
    %533 = vmatprep.subr.bf16.mxu0 0
    %534 = vmatpush1.bf16.msra.mxu0 0
    %535 = vmatprep.subr.bf16.mxu0 0
    %536 = vmatpush1.bf16.msra.mxu0 0
    %537 = vmatprep.subr.bf16.mxu0 0
    %538 = vmatpush1.bf16.msra.mxu0 0
    %539 = vmatprep.subr.bf16.mxu0 0
    %540 = vmatpush1.bf16.msra.mxu0 0
    %541 = vmatprep.subr.bf16.mxu0 0
    %542 = vmatpush1.bf16.msra.mxu0 0
    %543 = vmatprep.subr.bf16.mxu0 0
    %544 = vmatpush1.bf16.msra.mxu0 0
    %545 = vmatprep.mubr.bf16.mxu0 0
    %546 = vmatmul.mubr.bf16.gmra.mrb[0].mxu0 %v216
    %v547 = vpop.f32.mrb[0].mxu0
    %v548 = vadd.f32 0.0, %v547
    %v549 = vpop.f32.mrb[0].mxu0
    %v550 = vpop.f32.mrb[0].mxu0
    %v551 = vadd.f32 0.0, %v550
    %v552 = vpop.f32.mrb[0].mxu0
    %553 = vmatprep.mubr.bf16.mxu0 0
    %554 = vmatmul.mubr.bf16.gmra.mrb[0].mxu0 %v217
    %v555 = vpop.f32.mrb[0].mxu0
    %v556 = vadd.f32 0.0, %v555
    %v557 = vpop.f32.mrb[0].mxu0
    %v558 = vpop.f32.mrb[0].mxu0
    %v559 = vadd.f32 0.0, %v558
    %v560 = vpop.f32.mrb[0].mxu0
    %561 = vmatprep.mubr.bf16.mxu0 0
    %562 = vmatmul.mubr.bf16.gmra.mrb[0].mxu0 %v218
    %v563 = vpop.f32.mrb[0].mxu0
    %v564 = vadd.f32 0.0, %v563
    %v565 = vpop.f32.mrb[0].mxu0
    %v566 = vpop.f32.mrb[0].mxu0
    %v567 = vadd.f32 0.0, %v566
    %v568 = vpop.f32.mrb[0].mxu0
    %569 = vmatprep.mubr.bf16.mxu0 0
    %570 = vmatmul.mubr.bf16.gmra.mrb[0].mxu0 %v219
    %v571 = vpop.f32.mrb[0].mxu0
    %v572 = vadd.f32 0.0, %v571
    %v573 = vpop.f32.mrb[0].mxu0
    %v574 = vpop.f32.mrb[0].mxu0
    %v575 = vadd.f32 0.0, %v574
    %v576 = vpop.f32.mrb[0].mxu0
    %577 = vmatprep.mubr.bf16.mxu0 0
    %578 = vmatmul.mubr.bf16.gmra.mrb[0].mxu0 %v220
    %v579 = vpop.f32.mrb[0].mxu0
    %v580 = vadd.f32 0.0, %v579
    %v581 = vpop.f32.mrb[0].mxu0
    %v582 = vpop.f32.mrb[0].mxu0
    %v583 = vadd.f32 0.0, %v582
    %v584 = vpop.f32.mrb[0].mxu0
    %585 = vmatprep.mubr.bf16.mxu0 0
    %586 = vmatmul.mubr.bf16.gmra.mrb[0].mxu0 %v221
    %v587 = vpop.f32.mrb[0].mxu0
    %v588 = vadd.f32 0.0, %v587
    %v589 = vpop.f32.mrb[0].mxu0
    %v590 = vpop.f32.mrb[0].mxu0
    %v591 = vadd.f32 0.0, %v590
    %v592 = vpop.f32.mrb[0].mxu0
    %593 = vmatprep.mubr.bf16.mxu0 0
    %594 = vmatmul.mubr.bf16.gmra.mrb[0].mxu0 %v222
    %v595 = vpop.f32.mrb[0].mxu0
    %v596 = vadd.f32 0.0, %v595
    %v597 = vpop.f32.mrb[0].mxu0
    %v598 = vpop.f32.mrb[0].mxu0
    %v599 = vadd.f32 0.0, %v598
    %v600 = vpop.f32.mrb[0].mxu0
    %601 = vmatprep.mubr.bf16.mxu0 0
    %602 = vmatmul.mubr.bf16.gmra.mrb[0].mxu0 %v223
    %v603 = vpop.f32.mrb[0].mxu0
    %v604 = vadd.f32 0.0, %v603
    %v605 = vpop.f32.mrb[0].mxu0
    %v606 = vpop.f32.mrb[0].mxu0
    %v607 = vadd.f32 0.0, %v606
    %v608 = vpop.f32.mrb[0].mxu0
    %609 = vdwg.mxu0
    %v626 = vunpack.c.l.b16 %v433
    %v627 = vunpack.c.l.b16 %v434
    %v628 = vunpack.c.l.b16 %v435
    %v629 = vunpack.c.l.b16 %v436
    %v630 = vunpack.c.l.b16 %v437
    %v631 = vunpack.c.l.b16 %v438
    %v632 = vunpack.c.l.b16 %v439
    %v633 = vunpack.c.l.b16 %v440
    %v634 = vunpack.c.l.b16 %v441
    %v635 = vunpack.c.l.b16 %v442
    %v636 = vunpack.c.l.b16 %v443
    %v637 = vunpack.c.l.b16 %v444
    %v638 = vunpack.c.l.b16 %v445
    %v639 = vunpack.c.l.b16 %v446
    %v640 = vunpack.c.l.b16 %v447
    %v641 = vunpack.c.l.b16 %v448
    %v642 = vpack.c.b16 %v627, %v626
    %v643 = vpack.c.b16 %v629, %v628
    %v644 = vpack.c.b16 %v631, %v630
    %v645 = vpack.c.b16 %v633, %v632
    %v646 = vpack.c.b16 %v635, %v634
    %v647 = vpack.c.b16 %v637, %v636
    %v648 = vpack.c.b16 %v639, %v638
    %v649 = vpack.c.b16 %v641, %v640
    %658 = vmatprep.subr.bf16.mxu0 0
    %659 = vmatpush1.bf16.msra.mxu0 %v642
    %660 = vmatprep.subr.bf16.mxu0 0
    %661 = vmatpush1.bf16.msra.mxu0 %v643
    %662 = vmatprep.subr.bf16.mxu0 0
    %663 = vmatpush1.bf16.msra.mxu0 %v644
    %664 = vmatprep.subr.bf16.mxu0 0
    %665 = vmatpush1.bf16.msra.mxu0 %v645
    %666 = vmatprep.subr.bf16.mxu0 0
    %667 = vmatpush1.bf16.msra.mxu0 %v646
    %668 = vmatprep.subr.bf16.mxu0 0
    %669 = vmatpush1.bf16.msra.mxu0 %v647
    %670 = vmatprep.subr.bf16.mxu0 0
    %671 = vmatpush1.bf16.msra.mxu0 %v648
    %672 = vmatprep.subr.bf16.mxu0 0
    %673 = vmatpush1.bf16.msra.mxu0 %v649
    %674 = vmatprep.subr.bf16.mxu0 0
    %675 = vmatpush1.bf16.msra.mxu0 0
    %676 = vmatprep.subr.bf16.mxu0 0
    %677 = vmatpush1.bf16.msra.mxu0 0
    %678 = vmatprep.subr.bf16.mxu0 0
    %679 = vmatpush1.bf16.msra.mxu0 0
    %680 = vmatprep.subr.bf16.mxu0 0
    %681 = vmatpush1.bf16.msra.mxu0 0
    %682 = vmatprep.subr.bf16.mxu0 0
    %683 = vmatpush1.bf16.msra.mxu0 0
    %684 = vmatprep.subr.bf16.mxu0 0
    %685 = vmatpush1.bf16.msra.mxu0 0
    %686 = vmatprep.subr.bf16.mxu0 0
    %687 = vmatpush1.bf16.msra.mxu0 0
    %688 = vmatprep.subr.bf16.mxu0 0
    %689 = vmatpush1.bf16.msra.mxu0 0
    %690 = vmatprep.mubr.bf16.mxu0 0
    %691 = vmatmul.mubr.bf16.gmra.mrb[0].mxu0 %v425
    %v692 = vpop.f32.mrb[0].mxu0
    %v693 = vadd.f32 %v548, %v692
    %v694 = vpop.f32.mrb[0].mxu0
    %v695 = vpop.f32.mrb[0].mxu0
    %v696 = vadd.f32 %v551, %v695
    %v697 = vpop.f32.mrb[0].mxu0
    %698 = vmatprep.mubr.bf16.mxu0 0
    %699 = vmatmul.mubr.bf16.gmra.mrb[0].mxu0 %v426
    %v700 = vpop.f32.mrb[0].mxu0
    %v701 = vadd.f32 %v556, %v700
    %v702 = vpop.f32.mrb[0].mxu0
    %v703 = vpop.f32.mrb[0].mxu0
    %v704 = vadd.f32 %v559, %v703
    %v705 = vpop.f32.mrb[0].mxu0
    %706 = vmatprep.mubr.bf16.mxu0 0
    %707 = vmatmul.mubr.bf16.gmra.mrb[0].mxu0 %v427
    %v708 = vpop.f32.mrb[0].mxu0
    %v709 = vadd.f32 %v564, %v708
    %v710 = vpop.f32.mrb[0].mxu0
    %v711 = vpop.f32.mrb[0].mxu0
    %v712 = vadd.f32 %v567, %v711
    %v713 = vpop.f32.mrb[0].mxu0
    %714 = vmatprep.mubr.bf16.mxu0 0
    %715 = vmatmul.mubr.bf16.gmra.mrb[0].mxu0 %v428
    %v716 = vpop.f32.mrb[0].mxu0
    %v717 = vadd.f32 %v572, %v716
    %v718 = vpop.f32.mrb[0].mxu0
    %v719 = vpop.f32.mrb[0].mxu0
    %v720 = vadd.f32 %v575, %v719
    %v721 = vpop.f32.mrb[0].mxu0
    %722 = vmatprep.mubr.bf16.mxu0 0
    %723 = vmatmul.mubr.bf16.gmra.mrb[0].mxu0 %v429
    %v724 = vpop.f32.mrb[0].mxu0
    %v725 = vadd.f32 %v580, %v724
    %v726 = vpop.f32.mrb[0].mxu0
    %v727 = vpop.f32.mrb[0].mxu0
    %v728 = vadd.f32 %v583, %v727
    %v729 = vpop.f32.mrb[0].mxu0
    %730 = vmatprep.mubr.bf16.mxu0 0
    %731 = vmatmul.mubr.bf16.gmra.mrb[0].mxu0 %v430
    %v732 = vpop.f32.mrb[0].mxu0
    %v733 = vadd.f32 %v588, %v732
    %v734 = vpop.f32.mrb[0].mxu0
    %v735 = vpop.f32.mrb[0].mxu0
    %v736 = vadd.f32 %v591, %v735
    %v737 = vpop.f32.mrb[0].mxu0
    %738 = vmatprep.mubr.bf16.mxu0 0
    %739 = vmatmul.mubr.bf16.gmra.mrb[0].mxu0 %v431
    %v740 = vpop.f32.mrb[0].mxu0
    %v741 = vadd.f32 %v596, %v740
    %v742 = vpop.f32.mrb[0].mxu0
    %v743 = vpop.f32.mrb[0].mxu0
    %v744 = vadd.f32 %v599, %v743
    %v745 = vpop.f32.mrb[0].mxu0
    %746 = vmatprep.mubr.bf16.mxu0 0
    %747 = vmatmul.mubr.bf16.gmra.mrb[0].mxu0 %v432
    %v748 = vpop.f32.mrb[0].mxu0
    %v749 = vadd.f32 %v604, %v748
    %v750 = vpop.f32.mrb[0].mxu0
    %v751 = vpop.f32.mrb[0].mxu0
    %v752 = vadd.f32 %v607, %v751
    %v753 = vpop.f32.mrb[0].mxu0
    %754 = vdwg.mxu0
    %v755 = vld [vmem:[%s5] sm:$0x1]
    %v757 = vlaneseq
    %v758 = vshrl.u32 %v757, 7
    %v759 = vsub.s32 0, %v758
    %v760 = vrot.slane %v755, %v759
    %v762 = vadd.f32 %v693, %v760
    %v763 = vadd.f32 %v696, %v760
    %v764 = vadd.f32 %v701, %v760
    %v765 = vadd.f32 %v704, %v760
    %v766 = vadd.f32 %v709, %v760
    %v767 = vadd.f32 %v712, %v760
    %v768 = vadd.f32 %v717, %v760
    %v769 = vadd.f32 %v720, %v760
    %v770 = vadd.f32 %v725, %v760
    %v771 = vadd.f32 %v728, %v760
    %v772 = vadd.f32 %v733, %v760
    %v773 = vadd.f32 %v736, %v760
    %v774 = vadd.f32 %v741, %v760
    %v775 = vadd.f32 %v744, %v760
    %v776 = vadd.f32 %v749, %v760
    %v777 = vadd.f32 %v752, %v760
    %v778 = vmax.f32 %v762, 0.0
    %v779 = vmax.f32 %v763, 0.0
    %v780 = vmax.f32 %v764, 0.0
    %v781 = vmax.f32 %v765, 0.0
    %v782 = vmax.f32 %v766, 0.0
    %v783 = vmax.f32 %v767, 0.0
    %v784 = vmax.f32 %v768, 0.0
    %v785 = vmax.f32 %v769, 0.0
    %v786 = vmax.f32 %v770, 0.0
    %v787 = vmax.f32 %v771, 0.0
    %v788 = vmax.f32 %v772, 0.0
    %v789 = vmax.f32 %v773, 0.0
    %v790 = vmax.f32 %v774, 0.0
    %v791 = vmax.f32 %v775, 0.0
    %v792 = vmax.f32 %v776, 0.0
    %v793 = vmax.f32 %v777, 0.0
    %v794 = vpack.c.bf16 %v779, %v778
    %v795 = vpack.c.bf16 %v781, %v780
    %v796 = vpack.c.bf16 %v783, %v782
    %v797 = vpack.c.bf16 %v785, %v784
    %v798 = vpack.c.bf16 %v787, %v786
    %v799 = vpack.c.bf16 %v789, %v788
    %v800 = vpack.c.bf16 %v791, %v790
    %v801 = vpack.c.bf16 %v793, %v792
    %802 = vst [vmem:[#allocation2] sm:$0xff] %v794
    %803 = vst [vmem:[#allocation2 + $0x8] sm:$0xff] %v795
    %804 = vst [vmem:[#allocation2 + $0x10] sm:$0xff] %v796
    %805 = vst [vmem:[#allocation2 + $0x18] sm:$0xff] %v797
    %806 = vst [vmem:[#allocation2 + $0x20] sm:$0xff] %v798
    %807 = vst [vmem:[#allocation2 + $0x28] sm:$0xff] %v799
    %808 = vst [vmem:[#allocation2 + $0x30] sm:$0xff] %v800
    %809 = vst [vmem:[#allocation2 + $0x38] sm:$0xff] %v801
    %v810 = vld [vmem:[#allocation2] sm:$0xff]
    %v811 = vld [vmem:[#allocation2 + $0x8] sm:$0xff]
    %v812 = vld [vmem:[#allocation2 + $0x10] sm:$0xff]
    %v813 = vld [vmem:[#allocation2 + $0x18] sm:$0xff]
    %v814 = vld [vmem:[#allocation2 + $0x20] sm:$0xff]
    %v815 = vld [vmem:[#allocation2 + $0x28] sm:$0xff]
    %v816 = vld [vmem:[#allocation2 + $0x30] sm:$0xff]
    %v817 = vld [vmem:[#allocation2 + $0x38] sm:$0xff]
    %v818 = vld [vmem:[%s0] sm:$0xf]
    %v819 = vld [vmem:[%s0 + $0x4] sm:$0xf]
    %v820 = vld [vmem:[%s0 + $0x8] sm:$0xf]
    %v821 = vld [vmem:[%s0 + $0xc] sm:$0xf]
    %v822 = vld [vmem:[%s0 + $0x10] sm:$0xf]
    %v823 = vld [vmem:[%s0 + $0x14] sm:$0xf]
    %v824 = vld [vmem:[%s0 + $0x18] sm:$0xf]
    %v825 = vld [vmem:[%s0 + $0x1c] sm:$0xf]
    %v826 = vld [vmem:[%s0 + $0x20] sm:$0xf]
    %v827 = vld [vmem:[%s0 + $0x24] sm:$0xf]
    %v828 = vld [vmem:[%s0 + $0x28] sm:$0xf]
    %v829 = vld [vmem:[%s0 + $0x2c] sm:$0xf]
    %v830 = vld [vmem:[%s0 + $0x30] sm:$0xf]
    %v831 = vld [vmem:[%s0 + $0x34] sm:$0xf]
    %v832 = vld [vmem:[%s0 + $0x38] sm:$0xf]
    %v833 = vld [vmem:[%s0 + $0x3c] sm:$0xf]
    %v850 = vunpack.c.l.b16 %v818
    %v851 = vunpack.c.l.b16 %v819
    %v852 = vunpack.c.l.b16 %v820
    %v853 = vunpack.c.l.b16 %v821
    %v854 = vunpack.c.l.b16 %v822
    %v855 = vunpack.c.l.b16 %v823
    %v856 = vunpack.c.l.b16 %v824
    %v857 = vunpack.c.l.b16 %v825
    %v858 = vunpack.c.l.b16 %v826
    %v859 = vunpack.c.l.b16 %v827
    %v860 = vunpack.c.l.b16 %v828
    %v861 = vunpack.c.l.b16 %v829
    %v862 = vunpack.c.l.b16 %v830
    %v863 = vunpack.c.l.b16 %v831
    %v864 = vunpack.c.l.b16 %v832
    %v865 = vunpack.c.l.b16 %v833
    %v866 = vpack.c.b16 %v851, %v850
    %v867 = vpack.c.b16 %v853, %v852
    %v868 = vpack.c.b16 %v855, %v854
    %v869 = vpack.c.b16 %v857, %v856
    %v870 = vpack.c.b16 %v859, %v858
    %v871 = vpack.c.b16 %v861, %v860
    %v872 = vpack.c.b16 %v863, %v862
    %v873 = vpack.c.b16 %v865, %v864
    %882 = vmatprep.subr.bf16.mxu0 0
    %883 = vmatpush1.bf16.msra.mxu0 %v810
    %884 = vmatprep.subr.bf16.mxu0 0
    %885 = vmatpush1.bf16.msra.mxu0 %v811
    %886 = vmatprep.subr.bf16.mxu0 0
    %887 = vmatpush1.bf16.msra.mxu0 %v812
    %888 = vmatprep.subr.bf16.mxu0 0
    %889 = vmatpush1.bf16.msra.mxu0 %v813
    %890 = vmatprep.subr.bf16.mxu0 0
    %891 = vmatpush1.bf16.msra.mxu0 %v814
    %892 = vmatprep.subr.bf16.mxu0 0
    %893 = vmatpush1.bf16.msra.mxu0 %v815
    %894 = vmatprep.subr.bf16.mxu0 0
    %895 = vmatpush1.bf16.msra.mxu0 %v816
    %896 = vmatprep.subr.bf16.mxu0 0
    %897 = vmatpush1.bf16.msra.mxu0 %v817
    %898 = vmatprep.subr.bf16.mxu0 0
    %899 = vmatpush1.bf16.msra.mxu0 0
    %900 = vmatprep.subr.bf16.mxu0 0
    %901 = vmatpush1.bf16.msra.mxu0 0
    %902 = vmatprep.subr.bf16.mxu0 0
    %903 = vmatpush1.bf16.msra.mxu0 0
    %904 = vmatprep.subr.bf16.mxu0 0
    %905 = vmatpush1.bf16.msra.mxu0 0
    %906 = vmatprep.subr.bf16.mxu0 0
    %907 = vmatpush1.bf16.msra.mxu0 0
    %908 = vmatprep.subr.bf16.mxu0 0
    %909 = vmatpush1.bf16.msra.mxu0 0
    %910 = vmatprep.subr.bf16.mxu0 0
    %911 = vmatpush1.bf16.msra.mxu0 0
    %912 = vmatprep.subr.bf16.mxu0 0
    %913 = vmatpush1.bf16.msra.mxu0 0
    %914 = vmatprep.mubr.bf16.mxu0 0
    %915 = vmatmul.mubr.bf16.gmra.mrb[0].mxu0 %v866
    %v916 = vpop.f32.mrb[0].mxu0
    %v917 = vadd.f32 0.0, %v916
    %v918 = vpop.f32.mrb[0].mxu0
    %v919 = vpop.f32.mrb[0].mxu0
    %v920 = vadd.f32 0.0, %v919
    %v921 = vpop.f32.mrb[0].mxu0
    %922 = vmatprep.mubr.bf16.mxu0 0
    %923 = vmatmul.mubr.bf16.gmra.mrb[0].mxu0 %v867
    %v924 = vpop.f32.mrb[0].mxu0
    %v925 = vadd.f32 0.0, %v924
    %v926 = vpop.f32.mrb[0].mxu0
    %v927 = vpop.f32.mrb[0].mxu0
    %v928 = vadd.f32 0.0, %v927
    %v929 = vpop.f32.mrb[0].mxu0
    %930 = vmatprep.mubr.bf16.mxu0 0
    %931 = vmatmul.mubr.bf16.gmra.mrb[0].mxu0 %v868
    %v932 = vpop.f32.mrb[0].mxu0
    %v933 = vadd.f32 0.0, %v932
    %v934 = vpop.f32.mrb[0].mxu0
    %v935 = vpop.f32.mrb[0].mxu0
    %v936 = vadd.f32 0.0, %v935
    %v937 = vpop.f32.mrb[0].mxu0
    %938 = vmatprep.mubr.bf16.mxu0 0
    %939 = vmatmul.mubr.bf16.gmra.mrb[0].mxu0 %v869
    %v940 = vpop.f32.mrb[0].mxu0
    %v941 = vadd.f32 0.0, %v940
    %v942 = vpop.f32.mrb[0].mxu0
    %v943 = vpop.f32.mrb[0].mxu0
    %v944 = vadd.f32 0.0, %v943
    %v945 = vpop.f32.mrb[0].mxu0
    %946 = vmatprep.mubr.bf16.mxu0 0
    %947 = vmatmul.mubr.bf16.gmra.mrb[0].mxu0 %v870
    %v948 = vpop.f32.mrb[0].mxu0
    %v949 = vadd.f32 0.0, %v948
    %v950 = vpop.f32.mrb[0].mxu0
    %v951 = vpop.f32.mrb[0].mxu0
    %v952 = vadd.f32 0.0, %v951
    %v953 = vpop.f32.mrb[0].mxu0
    %954 = vmatprep.mubr.bf16.mxu0 0
    %955 = vmatmul.mubr.bf16.gmra.mrb[0].mxu0 %v871
    %v956 = vpop.f32.mrb[0].mxu0
    %v957 = vadd.f32 0.0, %v956
    %v958 = vpop.f32.mrb[0].mxu0
    %v959 = vpop.f32.mrb[0].mxu0
    %v960 = vadd.f32 0.0, %v959
    %v961 = vpop.f32.mrb[0].mxu0
    %962 = vmatprep.mubr.bf16.mxu0 0
    %963 = vmatmul.mubr.bf16.gmra.mrb[0].mxu0 %v872
    %v964 = vpop.f32.mrb[0].mxu0
    %v965 = vadd.f32 0.0, %v964
    %v966 = vpop.f32.mrb[0].mxu0
    %v967 = vpop.f32.mrb[0].mxu0
    %v968 = vadd.f32 0.0, %v967
    %v969 = vpop.f32.mrb[0].mxu0
    %970 = vmatprep.mubr.bf16.mxu0 0
    %971 = vmatmul.mubr.bf16.gmra.mrb[0].mxu0 %v873
    %v972 = vpop.f32.mrb[0].mxu0
    %v973 = vadd.f32 0.0, %v972
    %v974 = vpop.f32.mrb[0].mxu0
    %v975 = vpop.f32.mrb[0].mxu0
    %v976 = vadd.f32 0.0, %v975
    %v977 = vpop.f32.mrb[0].mxu0
    %978 = vdwg.mxu0
    %v979 = vmul.f32 %v917, %v332
    %v980 = vmul.f32 %v920, %v337
    %v981 = vmul.f32 %v925, %v342
    %v982 = vmul.f32 %v928, %v347
    %v983 = vmul.f32 %v933, %v352
    %v984 = vmul.f32 %v936, %v357
    %v985 = vmul.f32 %v941, %v362
    %v986 = vmul.f32 %v944, %v367
    %v987 = vmul.f32 %v949, %v372
    %v988 = vmul.f32 %v952, %v377
    %v989 = vmul.f32 %v957, %v382
    %v990 = vmul.f32 %v960, %v387
    %v991 = vmul.f32 %v965, %v392
    %v992 = vmul.f32 %v968, %v397
    %v993 = vmul.f32 %v973, %v402
    %v994 = vmul.f32 %v976, %v407
    %v995 = vpack.c.bf16 %v980, %v979
    %v996 = vpack.c.bf16 %v982, %v981
    %v997 = vpack.c.bf16 %v984, %v983
    %v998 = vpack.c.bf16 %v986, %v985
    %v999 = vpack.c.bf16 %v988, %v987
    %v1000 = vpack.c.bf16 %v990, %v989
    %v1001 = vpack.c.bf16 %v992, %v991
    %v1002 = vpack.c.bf16 %v994, %v993
    %v1003 = vld [vmem:[#allocation7] sm:$0xf]
    %v1004 = vld [vmem:[#allocation7 + $0x4] sm:$0xf]
    %v1005 = vld [vmem:[#allocation7 + $0x8] sm:$0xf]
    %v1006 = vld [vmem:[#allocation7 + $0xc] sm:$0xf]
    %v1007 = vld [vmem:[#allocation7 + $0x10] sm:$0xf]
    %v1008 = vld [vmem:[#allocation7 + $0x14] sm:$0xf]
    %v1009 = vld [vmem:[#allocation7 + $0x18] sm:$0xf]
    %v1010 = vld [vmem:[#allocation7 + $0x1c] sm:$0xf]
    %v1011 = vld [vmem:[#allocation7 + $0x20] sm:$0xf]
    %v1012 = vld [vmem:[#allocation7 + $0x24] sm:$0xf]
    %v1013 = vld [vmem:[#allocation7 + $0x28] sm:$0xf]
    %v1014 = vld [vmem:[#allocation7 + $0x2c] sm:$0xf]
    %v1015 = vld [vmem:[#allocation7 + $0x30] sm:$0xf]
    %v1016 = vld [vmem:[#allocation7 + $0x34] sm:$0xf]
    %v1017 = vld [vmem:[#allocation7 + $0x38] sm:$0xf]
    %v1018 = vld [vmem:[#allocation7 + $0x3c] sm:$0xf]
    %v1019 = vld [vmem:[#allocation8] sm:$0xf]
    %v1020 = vld [vmem:[#allocation8 + $0x4] sm:$0xf]
    %v1021 = vld [vmem:[#allocation8 + $0x8] sm:$0xf]
    %v1022 = vld [vmem:[#allocation8 + $0xc] sm:$0xf]
    %v1023 = vld [vmem:[#allocation8 + $0x10] sm:$0xf]
    %v1024 = vld [vmem:[#allocation8 + $0x14] sm:$0xf]
    %v1025 = vld [vmem:[#allocation8 + $0x18] sm:$0xf]
    %v1026 = vld [vmem:[#allocation8 + $0x1c] sm:$0xf]
    %v1027 = vld [vmem:[#allocation8 + $0x20] sm:$0xf]
    %v1028 = vld [vmem:[#allocation8 + $0x24] sm:$0xf]
    %v1029 = vld [vmem:[#allocation8 + $0x28] sm:$0xf]
    %v1030 = vld [vmem:[#allocation8 + $0x2c] sm:$0xf]
    %v1031 = vld [vmem:[#allocation8 + $0x30] sm:$0xf]
    %v1032 = vld [vmem:[#allocation8 + $0x34] sm:$0xf]
    %v1033 = vld [vmem:[#allocation8 + $0x38] sm:$0xf]
    %v1034 = vld [vmem:[#allocation8 + $0x3c] sm:$0xf]
    %v1051 = vunpack.c.l.b16 %v1019
    %v1052 = vunpack.c.l.b16 %v1020
    %v1053 = vunpack.c.l.b16 %v1021
    %v1054 = vunpack.c.l.b16 %v1022
    %v1055 = vunpack.c.l.b16 %v1023
    %v1056 = vunpack.c.l.b16 %v1024
    %v1057 = vunpack.c.l.b16 %v1025
    %v1058 = vunpack.c.l.b16 %v1026
    %v1059 = vunpack.c.l.b16 %v1027
    %v1060 = vunpack.c.l.b16 %v1028
    %v1061 = vunpack.c.l.b16 %v1029
    %v1062 = vunpack.c.l.b16 %v1030
    %v1063 = vunpack.c.l.b16 %v1031
    %v1064 = vunpack.c.l.b16 %v1032
    %v1065 = vunpack.c.l.b16 %v1033
    %v1066 = vunpack.c.l.b16 %v1034
    %v1067 = vpack.c.b16 %v1052, %v1051
    %v1068 = vpack.c.b16 %v1054, %v1053
    %v1069 = vpack.c.b16 %v1056, %v1055
    %v1070 = vpack.c.b16 %v1058, %v1057
    %v1071 = vpack.c.b16 %v1060, %v1059
    %v1072 = vpack.c.b16 %v1062, %v1061
    %v1073 = vpack.c.b16 %v1064, %v1063
    %v1074 = vpack.c.b16 %v1066, %v1065
    %1083 = vmatprep.subr.bf16.mxu0 0
    %1084 = vmatpush1.bf16.msra.mxu0 %v1067
    %1085 = vmatprep.subr.bf16.mxu0 0
    %1086 = vmatpush1.bf16.msra.mxu0 %v1068
    %1087 = vmatprep.subr.bf16.mxu0 0
    %1088 = vmatpush1.bf16.msra.mxu0 %v1069
    %1089 = vmatprep.subr.bf16.mxu0 0
    %1090 = vmatpush1.bf16.msra.mxu0 %v1070
    %1091 = vmatprep.subr.bf16.mxu0 0
    %1092 = vmatpush1.bf16.msra.mxu0 %v1071
    %1093 = vmatprep.subr.bf16.mxu0 0
    %1094 = vmatpush1.bf16.msra.mxu0 %v1072
    %1095 = vmatprep.subr.bf16.mxu0 0
    %1096 = vmatpush1.bf16.msra.mxu0 %v1073
    %1097 = vmatprep.subr.bf16.mxu0 0
    %1098 = vmatpush1.bf16.msra.mxu0 %v1074
    %1099 = vmatprep.subr.bf16.mxu0 0
    %1100 = vmatpush1.bf16.msra.mxu0 0
    %1101 = vmatprep.subr.bf16.mxu0 0
    %1102 = vmatpush1.bf16.msra.mxu0 0
    %1103 = vmatprep.subr.bf16.mxu0 0
    %1104 = vmatpush1.bf16.msra.mxu0 0
    %1105 = vmatprep.subr.bf16.mxu0 0
    %1106 = vmatpush1.bf16.msra.mxu0 0
    %1107 = vmatprep.subr.bf16.mxu0 0
    %1108 = vmatpush1.bf16.msra.mxu0 0
    %1109 = vmatprep.subr.bf16.mxu0 0
    %1110 = vmatpush1.bf16.msra.mxu0 0
    %1111 = vmatprep.subr.bf16.mxu0 0
    %1112 = vmatpush1.bf16.msra.mxu0 0
    %1113 = vmatprep.subr.bf16.mxu0 0
    %1114 = vmatpush1.bf16.msra.mxu0 0
    %1115 = vmatprep.mubr.bf16.mxu0 0
    %1116 = vmatmul.mubr.bf16.gmra.mrb[0].mxu0 %v810
    %v1117 = vpop.f32.mrb[0].mxu0
    %v1118 = vadd.f32 0.0, %v1117
    %v1119 = vpop.f32.mrb[0].mxu0
    %v1120 = vpop.f32.mrb[0].mxu0
    %v1121 = vadd.f32 0.0, %v1120
    %v1122 = vpop.f32.mrb[0].mxu0
    %1123 = vmatprep.mubr.bf16.mxu0 0
    %1124 = vmatmul.mubr.bf16.gmra.mrb[0].mxu0 %v811
    %v1125 = vpop.f32.mrb[0].mxu0
    %v1126 = vadd.f32 0.0, %v1125
    %v1127 = vpop.f32.mrb[0].mxu0
    %v1128 = vpop.f32.mrb[0].mxu0
    %v1129 = vadd.f32 0.0, %v1128
    %v1130 = vpop.f32.mrb[0].mxu0
    %1131 = vmatprep.mubr.bf16.mxu0 0
    %1132 = vmatmul.mubr.bf16.gmra.mrb[0].mxu0 %v812
    %v1133 = vpop.f32.mrb[0].mxu0
    %v1134 = vadd.f32 0.0, %v1133
    %v1135 = vpop.f32.mrb[0].mxu0
    %v1136 = vpop.f32.mrb[0].mxu0
    %v1137 = vadd.f32 0.0, %v1136
    %v1138 = vpop.f32.mrb[0].mxu0
    %1139 = vmatprep.mubr.bf16.mxu0 0
    %1140 = vmatmul.mubr.bf16.gmra.mrb[0].mxu0 %v813
    %v1141 = vpop.f32.mrb[0].mxu0
    %v1142 = vadd.f32 0.0, %v1141
    %v1143 = vpop.f32.mrb[0].mxu0
    %v1144 = vpop.f32.mrb[0].mxu0
    %v1145 = vadd.f32 0.0, %v1144
    %v1146 = vpop.f32.mrb[0].mxu0
    %1147 = vmatprep.mubr.bf16.mxu0 0
    %1148 = vmatmul.mubr.bf16.gmra.mrb[0].mxu0 %v814
    %v1149 = vpop.f32.mrb[0].mxu0
    %v1150 = vadd.f32 0.0, %v1149
    %v1151 = vpop.f32.mrb[0].mxu0
    %v1152 = vpop.f32.mrb[0].mxu0
    %v1153 = vadd.f32 0.0, %v1152
    %v1154 = vpop.f32.mrb[0].mxu0
    %1155 = vmatprep.mubr.bf16.mxu0 0
    %1156 = vmatmul.mubr.bf16.gmra.mrb[0].mxu0 %v815
    %v1157 = vpop.f32.mrb[0].mxu0
    %v1158 = vadd.f32 0.0, %v1157
    %v1159 = vpop.f32.mrb[0].mxu0
    %v1160 = vpop.f32.mrb[0].mxu0
    %v1161 = vadd.f32 0.0, %v1160
    %v1162 = vpop.f32.mrb[0].mxu0
    %1163 = vmatprep.mubr.bf16.mxu0 0
    %1164 = vmatmul.mubr.bf16.gmra.mrb[0].mxu0 %v816
    %v1165 = vpop.f32.mrb[0].mxu0
    %v1166 = vadd.f32 0.0, %v1165
    %v1167 = vpop.f32.mrb[0].mxu0
    %v1168 = vpop.f32.mrb[0].mxu0
    %v1169 = vadd.f32 0.0, %v1168
    %v1170 = vpop.f32.mrb[0].mxu0
    %1171 = vmatprep.mubr.bf16.mxu0 0
    %1172 = vmatmul.mubr.bf16.gmra.mrb[0].mxu0 %v817
    %v1173 = vpop.f32.mrb[0].mxu0
    %v1174 = vadd.f32 0.0, %v1173
    %v1175 = vpop.f32.mrb[0].mxu0
    %v1176 = vpop.f32.mrb[0].mxu0
    %v1177 = vadd.f32 0.0, %v1176
    %v1178 = vpop.f32.mrb[0].mxu0
    %1179 = vdwg.mxu0
    %v1196 = vunpack.c.l.b16 %v1003
    %v1197 = vunpack.c.l.b16 %v1004
    %v1198 = vunpack.c.l.b16 %v1005
    %v1199 = vunpack.c.l.b16 %v1006
    %v1200 = vunpack.c.l.b16 %v1007
    %v1201 = vunpack.c.l.b16 %v1008
    %v1202 = vunpack.c.l.b16 %v1009
    %v1203 = vunpack.c.l.b16 %v1010
    %v1204 = vunpack.c.l.b16 %v1011
    %v1205 = vunpack.c.l.b16 %v1012
    %v1206 = vunpack.c.l.b16 %v1013
    %v1207 = vunpack.c.l.b16 %v1014
    %v1208 = vunpack.c.l.b16 %v1015
    %v1209 = vunpack.c.l.b16 %v1016
    %v1210 = vunpack.c.l.b16 %v1017
    %v1211 = vunpack.c.l.b16 %v1018
    %v1212 = vpack.c.b16 %v1197, %v1196
    %v1213 = vpack.c.b16 %v1199, %v1198
    %v1214 = vpack.c.b16 %v1201, %v1200
    %v1215 = vpack.c.b16 %v1203, %v1202
    %v1216 = vpack.c.b16 %v1205, %v1204
    %v1217 = vpack.c.b16 %v1207, %v1206
    %v1218 = vpack.c.b16 %v1209, %v1208
    %v1219 = vpack.c.b16 %v1211, %v1210
    %1228 = vmatprep.subr.bf16.mxu0 0
    %1229 = vmatpush1.bf16.msra.mxu0 %v1212
    %1230 = vmatprep.subr.bf16.mxu0 0
    %1231 = vmatpush1.bf16.msra.mxu0 %v1213
    %1232 = vmatprep.subr.bf16.mxu0 0
    %1233 = vmatpush1.bf16.msra.mxu0 %v1214
    %1234 = vmatprep.subr.bf16.mxu0 0
    %1235 = vmatpush1.bf16.msra.mxu0 %v1215
    %1236 = vmatprep.subr.bf16.mxu0 0
    %1237 = vmatpush1.bf16.msra.mxu0 %v1216
    %1238 = vmatprep.subr.bf16.mxu0 0
    %1239 = vmatpush1.bf16.msra.mxu0 %v1217
    %1240 = vmatprep.subr.bf16.mxu0 0
    %1241 = vmatpush1.bf16.msra.mxu0 %v1218
    %1242 = vmatprep.subr.bf16.mxu0 0
    %1243 = vmatpush1.bf16.msra.mxu0 %v1219
    %1244 = vmatprep.subr.bf16.mxu0 0
    %1245 = vmatpush1.bf16.msra.mxu0 0
    %1246 = vmatprep.subr.bf16.mxu0 0
    %1247 = vmatpush1.bf16.msra.mxu0 0
    %1248 = vmatprep.subr.bf16.mxu0 0
    %1249 = vmatpush1.bf16.msra.mxu0 0
    %1250 = vmatprep.subr.bf16.mxu0 0
    %1251 = vmatpush1.bf16.msra.mxu0 0
    %1252 = vmatprep.subr.bf16.mxu0 0
    %1253 = vmatpush1.bf16.msra.mxu0 0
    %1254 = vmatprep.subr.bf16.mxu0 0
    %1255 = vmatpush1.bf16.msra.mxu0 0
    %1256 = vmatprep.subr.bf16.mxu0 0
    %1257 = vmatpush1.bf16.msra.mxu0 0
    %1258 = vmatprep.subr.bf16.mxu0 0
    %1259 = vmatpush1.bf16.msra.mxu0 0
    %1260 = vmatprep.mubr.bf16.mxu0 0
    %1261 = vmatmul.mubr.bf16.gmra.mrb[0].mxu0 %v995
    %v1262 = vpop.f32.mrb[0].mxu0
    %v1263 = vadd.f32 %v1118, %v1262
    %v1264 = vpop.f32.mrb[0].mxu0
    %v1265 = vpop.f32.mrb[0].mxu0
    %v1266 = vadd.f32 %v1121, %v1265
    %v1267 = vpop.f32.mrb[0].mxu0
    %1268 = vmatprep.mubr.bf16.mxu0 0
    %1269 = vmatmul.mubr.bf16.gmra.mrb[0].mxu0 %v996
    %v1270 = vpop.f32.mrb[0].mxu0
    %v1271 = vadd.f32 %v1126, %v1270
    %v1272 = vpop.f32.mrb[0].mxu0
    %v1273 = vpop.f32.mrb[0].mxu0
    %v1274 = vadd.f32 %v1129, %v1273
    %v1275 = vpop.f32.mrb[0].mxu0
    %1276 = vmatprep.mubr.bf16.mxu0 0
    %1277 = vmatmul.mubr.bf16.gmra.mrb[0].mxu0 %v997
    %v1278 = vpop.f32.mrb[0].mxu0
    %v1279 = vadd.f32 %v1134, %v1278
    %v1280 = vpop.f32.mrb[0].mxu0
    %v1281 = vpop.f32.mrb[0].mxu0
    %v1282 = vadd.f32 %v1137, %v1281
    %v1283 = vpop.f32.mrb[0].mxu0
    %1284 = vmatprep.mubr.bf16.mxu0 0
    %1285 = vmatmul.mubr.bf16.gmra.mrb[0].mxu0 %v998
    %v1286 = vpop.f32.mrb[0].mxu0
    %v1287 = vadd.f32 %v1142, %v1286
    %v1288 = vpop.f32.mrb[0].mxu0
    %v1289 = vpop.f32.mrb[0].mxu0
    %v1290 = vadd.f32 %v1145, %v1289
    %v1291 = vpop.f32.mrb[0].mxu0
    %1292 = vmatprep.mubr.bf16.mxu0 0
    %1293 = vmatmul.mubr.bf16.gmra.mrb[0].mxu0 %v999
    %v1294 = vpop.f32.mrb[0].mxu0
    %v1295 = vadd.f32 %v1150, %v1294
    %v1296 = vpop.f32.mrb[0].mxu0
    %v1297 = vpop.f32.mrb[0].mxu0
    %v1298 = vadd.f32 %v1153, %v1297
    %v1299 = vpop.f32.mrb[0].mxu0
    %1300 = vmatprep.mubr.bf16.mxu0 0
    %1301 = vmatmul.mubr.bf16.gmra.mrb[0].mxu0 %v1000
    %v1302 = vpop.f32.mrb[0].mxu0
    %v1303 = vadd.f32 %v1158, %v1302
    %v1304 = vpop.f32.mrb[0].mxu0
    %v1305 = vpop.f32.mrb[0].mxu0
    %v1306 = vadd.f32 %v1161, %v1305
    %v1307 = vpop.f32.mrb[0].mxu0
    %1308 = vmatprep.mubr.bf16.mxu0 0
    %1309 = vmatmul.mubr.bf16.gmra.mrb[0].mxu0 %v1001
    %v1310 = vpop.f32.mrb[0].mxu0
    %v1311 = vadd.f32 %v1166, %v1310
    %v1312 = vpop.f32.mrb[0].mxu0
    %v1313 = vpop.f32.mrb[0].mxu0
    %v1314 = vadd.f32 %v1169, %v1313
    %v1315 = vpop.f32.mrb[0].mxu0
    %1316 = vmatprep.mubr.bf16.mxu0 0
    %1317 = vmatmul.mubr.bf16.gmra.mrb[0].mxu0 %v1002
    %v1318 = vpop.f32.mrb[0].mxu0
    %v1319 = vadd.f32 %v1174, %v1318
    %v1320 = vpop.f32.mrb[0].mxu0
    %v1321 = vpop.f32.mrb[0].mxu0
    %v1322 = vadd.f32 %v1177, %v1321
    %v1323 = vpop.f32.mrb[0].mxu0
    %1324 = vdwg.mxu0
    %v1325 = vld [vmem:[%s8] sm:$0x1]
    %v1327 = vlaneseq
    %v1328 = vshrl.u32 %v1327, 7
    %v1329 = vsub.s32 0, %v1328
    %v1330 = vrot.slane %v1325, %v1329
    %v1332 = vadd.f32 %v1263, %v1330
    %v1333 = vadd.f32 %v1266, %v1330
    %v1334 = vadd.f32 %v1271, %v1330
    %v1335 = vadd.f32 %v1274, %v1330
    %v1336 = vadd.f32 %v1279, %v1330
    %v1337 = vadd.f32 %v1282, %v1330
    %v1338 = vadd.f32 %v1287, %v1330
    %v1339 = vadd.f32 %v1290, %v1330
    %v1340 = vadd.f32 %v1295, %v1330
    %v1341 = vadd.f32 %v1298, %v1330
    %v1342 = vadd.f32 %v1303, %v1330
    %v1343 = vadd.f32 %v1306, %v1330
    %v1344 = vadd.f32 %v1311, %v1330
    %v1345 = vadd.f32 %v1314, %v1330
    %v1346 = vadd.f32 %v1319, %v1330
    %v1347 = vadd.f32 %v1322, %v1330
    %v1348 = vmax.f32 %v1332, 0.0
    %v1349 = vmax.f32 %v1333, 0.0
    %v1350 = vmax.f32 %v1334, 0.0
    %v1351 = vmax.f32 %v1335, 0.0
    %v1352 = vmax.f32 %v1336, 0.0
    %v1353 = vmax.f32 %v1337, 0.0
    %v1354 = vmax.f32 %v1338, 0.0
    %v1355 = vmax.f32 %v1339, 0.0
    %v1356 = vmax.f32 %v1340, 0.0
    %v1357 = vmax.f32 %v1341, 0.0
    %v1358 = vmax.f32 %v1342, 0.0
    %v1359 = vmax.f32 %v1343, 0.0
    %v1360 = vmax.f32 %v1344, 0.0
    %v1361 = vmax.f32 %v1345, 0.0
    %v1362 = vmax.f32 %v1346, 0.0
    %v1363 = vmax.f32 %v1347, 0.0
    %1364 = vst [vmem:[%s9] sm:$0xff] %v1348
    %1365 = vst [vmem:[%s9 + $0x8] sm:$0xff] %v1349
    %1366 = vst [vmem:[%s9 + $0x10] sm:$0xff] %v1350
    %1367 = vst [vmem:[%s9 + $0x18] sm:$0xff] %v1351
    %1368 = vst [vmem:[%s9 + $0x20] sm:$0xff] %v1352
    %1369 = vst [vmem:[%s9 + $0x28] sm:$0xff] %v1353
    %1370 = vst [vmem:[%s9 + $0x30] sm:$0xff] %v1354
    %1371 = vst [vmem:[%s9 + $0x38] sm:$0xff] %v1355
    %1372 = vst [vmem:[%s9 + $0x40] sm:$0xff] %v1356
    %1373 = vst [vmem:[%s9 + $0x48] sm:$0xff] %v1357
    %1374 = vst [vmem:[%s9 + $0x50] sm:$0xff] %v1358
    %1375 = vst [vmem:[%s9 + $0x58] sm:$0xff] %v1359
    %1376 = vst [vmem:[%s9 + $0x60] sm:$0xff] %v1360
    %1377 = vst [vmem:[%s9 + $0x68] sm:$0xff] %v1361
    %1378 = vst [vmem:[%s9 + $0x70] sm:$0xff] %v1362
    %1379 = vst [vmem:[%s9 + $0x78] sm:$0xff] %v1363
    // Predicated region
    $region54: #{graphsage_forward.1} parent=1 // pred_check
      _
    $region55: #{graphsage_forward.1} parent=1 // pred_check_branch
      %1381 = sbr.rel (0) target = $region57
    $region56: #{graphsage_forward.1} parent=1 // pred_region
      _
    $region57: #{graphsage_forward.1} parent=1 // pred_fallthru
      _
    // Predicated region
    $region58: #{graphsage_forward.1} parent=1 // pred_check
      _
    $region59: #{graphsage_forward.1} parent=1 // pred_check_branch
      %1383 = sbr.rel (0) target = $region61
    $region60: #{graphsage_forward.1} parent=1 // pred_region
      _
    $region61: #{graphsage_forward.1} parent=1 // pred_fallthru
      _
    %1384 = vsyncpa [#allocation4], 1
    %1385 = vsyncpa [#allocation6], 1
    %1386 = vsyncpa [#allocation9], 1

</llo_original>
